<compile_context>
chip_gen: v7x
topology: tpu7x:2x2x1
jax: 0.10.0
libtpu: 0.0.40
codegen_flags: <defaults>
</compile_context>

<pallas_src>
import functools
import math

import jax
import jax.numpy as jnp
from jax import lax
from jax.experimental import pallas as pl
from jax.experimental.pallas import tpu as pltpu


def _mhsa_kernel(x_ref, wqkv_ref, bqkv_ref, wot_ref, bo_ref, o_ref, acc_ref,
                 *, G, D):
    """One (batch, head-group) pair per grid step.

    x_ref    : (1, S, E)          bf16  one batch element's sequence
    wqkv_ref : (NG, E, G*(3D+1))  bf16  fused per-group [q | k | v,1] weights
    bqkv_ref : (NG, 1, G*(3D+1))  f32   fused per-group biases (v has the 1)
    wot_ref  : (NG, E, G*D)       bf16  per-group combine weight, pre-transposed
    bo_ref   : (E, 1)             f32   combine bias (column vector)
    o_ref    : (1, E, S)          f32   transposed output block (per batch)
    acc_ref  : (E, S)             f32   scratch accumulator over head groups
    """
    g = pl.program_id(1)
    ng = pl.num_programs(1)

    x = x_ref[0]                                                    # (S, E) bf16

    # Fused, lane-dense projection for all G heads of the group (MXU, bf16
    # operands, f32 accumulation).  Column layout:
    #   [q_0..q_{G-1} (D each) | k_0..k_{G-1} (D each) | (v_0,1)..(v_{G-1},1)]
    # 1/sqrt(D) is pre-folded into the q columns; the all-ones column per head
    # makes the PV matmul also produce the softmax denominator.
    qkv = jnp.dot(x, wqkv_ref[g], preferred_element_type=jnp.float32)
    qkv = (qkv + bqkv_ref[g]).astype(jnp.bfloat16)                  # (S, G*(3D+1))

    ko = G * D
    vo = 2 * G * D
    attn = []
    for h in range(G):                       # static unroll over the head group
        q_h = qkv[:, h * D:(h + 1) * D]                             # (S, D)
        k_h = qkv[:, ko + h * D:ko + (h + 1) * D]                   # (S, D)
        v_h = qkv[:, vo + h * (D + 1):vo + (h + 1) * (D + 1)]       # (S, D+1)

        # Scores: contract the last dims directly -- no materialized K^T.
        s_h = lax.dot_general(q_h, k_h, (((1,), (1,)), ((), ())),
                              preferred_element_type=jnp.float32)   # (S, S) f32

        # Numerically stable softmax; normalization deferred past the PV matmul.
        m_h = jnp.max(s_h, axis=-1, keepdims=True)
        # TODO(synk): on v6e/v7x cast (s_h - m_h) to bf16 before exp to double
        # EUP throughput; kept f32 here for v5e compatibility.
        p_h = jnp.exp(s_h - m_h).astype(jnp.bfloat16)               # (S, S)

        # PV with the ones-augmented V: last output column is the row-sum.
        pv = jnp.dot(p_h, v_h, preferred_element_type=jnp.float32)  # (S, D+1)
        a_h = pv[:, :D] * pl.reciprocal(pv[:, D:], approx=True)     # (S, D) f32
        attn.append(a_h.astype(jnp.bfloat16))

    attn_cat = jnp.concatenate(attn, axis=-1) if G > 1 else attn[0]  # (S, G*D)

    # Combine projection for the whole group, emitted already transposed
    # (out^T = Wo_g^T @ attn^T) as a contract-last-dims dot_general, so the
    # final store is lane-dense along S and no HBM transpose follows the call.
    out_t = lax.dot_general(wot_ref[g], attn_cat, (((1,), (1,)), ((), ())),
                            preferred_element_type=jnp.float32)      # (E, S)

    @pl.when(g == 0)
    def _init():
        acc_ref[...] = jnp.zeros_like(acc_ref)

    acc_ref[...] += out_t

    @pl.when(g == ng - 1)
    def _store():
        o_ref[0] = acc_ref[...] + bo_ref[...]                        # (E, S)


def _head_group_size(num_heads, head_dim):
    """Largest divisor of num_heads with G*head_dim within 128 lanes."""
    max_g = max(1, 128 // head_dim)
    g = 1
    for cand in range(1, num_heads + 1):
        if num_heads % cand == 0 and cand <= max_g:
            g = cand
    return g


def _pack_params(params, num_heads, G):
    """Pre-pack weights for the kernel (done once, outside the kernel)."""
    wq, wk, wv, wo, bq, bk, bv, bo = params
    E = wq.shape[0]
    D = E // num_heads
    NG = num_heads // G
    scale = 1.0 / math.sqrt(D)

    def heads_w(w):   # (E, E) -> (NG, G, E, D): per-head output columns
        w = jnp.transpose(jnp.reshape(w, (E, num_heads, D)), (1, 0, 2))
        return jnp.reshape(w, (NG, G, E, D))

    def heads_b(b):   # (E,) -> (NG, G, D)
        return jnp.reshape(b, (NG, G, D))

    wq_h, bq_h = heads_w(wq * scale), heads_b(bq * scale)   # fold 1/sqrt(D)
    wk_h, bk_h = heads_w(wk), heads_b(bk)
    wv_h, bv_h = heads_w(wv), heads_b(bv)

    # ones-augment V: zero weight column + bias 1 -> projected column == 1,
    # so the PV matmul also yields the softmax row-sum (off the XLU).
    wv_h = jnp.concatenate([wv_h, jnp.zeros((NG, G, E, 1), wv_h.dtype)], axis=-1)
    bv_h = jnp.concatenate([bv_h, jnp.ones((NG, G, 1), bv_h.dtype)], axis=-1)

    def flat_w(t):    # (NG, G, E, d) -> (NG, E, G*d), head-major along lanes
        d = t.shape[-1]
        return jnp.reshape(jnp.transpose(t, (0, 2, 1, 3)), (NG, E, G * d))

    def flat_b(t):    # (NG, G, d) -> (NG, 1, G*d)
        return jnp.reshape(t, (NG, 1, -1))

    w_qkv = jnp.concatenate([flat_w(wq_h), flat_w(wk_h), flat_w(wv_h)],
                            axis=-1).astype(jnp.bfloat16)    # (NG, E, G*(3D+1))
    b_qkv = jnp.concatenate([flat_b(bq_h), flat_b(bk_h), flat_b(bv_h)],
                            axis=-1).astype(jnp.float32)     # (NG, 1, G*(3D+1))

    # Combine weight per group, pre-transposed.  wo rows are ordered
    # [head0 dims | head1 dims | ...], so group g uses rows g*G*D:(g+1)*G*D.
    w_o_t = jnp.transpose(jnp.reshape(wo, (NG, G * D, E)),
                          (0, 2, 1)).astype(jnp.bfloat16)    # (NG, E, G*D)
    b_o = jnp.reshape(bo, (E, 1)).astype(jnp.float32)
    return w_qkv, b_qkv, w_o_t, b_o


def multi_head_self_attention(x, params, num_heads):
    """x: (B, C, H, W) float32 NCHW.  Returns (B, C, H, W), matching torch."""
    B, C, H, W = x.shape
    E = C
    S = H * W
    assert E % num_heads == 0
    D = E // num_heads
    G = _head_group_size(num_heads, D)
    NG = num_heads // G
    NQKV = G * (3 * D + 1)

    # identical semantics to torch's x.reshape(B, H*W, -1) on contiguous NCHW
    x_seq = jnp.reshape(x, (B, S, E)).astype(jnp.bfloat16)
    w_qkv, b_qkv, w_o_t, b_o = _pack_params(params, num_heads, G)

    # Advisory cost estimate so XLA schedules surrounding ops around the call.
    flops = B * (8 * S * E * E + 4 * S * S * E)
    transcendentals = B * num_heads * S * S
    bytes_accessed = (x_seq.size * 2 + B * E * S * 4 + w_qkv.size * 2
                      + w_o_t.size * 2 + b_qkv.size * 4 + b_o.size * 4)

    out_t = pl.pallas_call(
        functools.partial(_mhsa_kernel, G=G, D=D),
        out_shape=jax.ShapeDtypeStruct((B, E, S), jnp.float32),
        grid_spec=pltpu.PrefetchScalarGridSpec(
            num_scalar_prefetch=0,
            grid=(B, NG),                  # head-group axis = reduction, last
            in_specs=[
                pl.BlockSpec((1, S, E), lambda b, g: (b, 0, 0)),      # x
                # weights/biases: full arrays resident in VMEM (constant index
                # maps) -> fetched once, never re-streamed per batch element.
                pl.BlockSpec((NG, E, NQKV), lambda b, g: (0, 0, 0)),  # Wqkv
                pl.BlockSpec((NG, 1, NQKV), lambda b, g: (0, 0, 0)),  # bqkv
                pl.BlockSpec((NG, E, G * D), lambda b, g: (0, 0, 0)), # Wo^T
                pl.BlockSpec((E, 1), lambda b, g: (0, 0)),            # bo
            ],
            out_specs=pl.BlockSpec((1, E, S), lambda b, g: (b, 0, 0)),
            scratch_shapes=[pltpu.VMEM((E, S), jnp.float32)],
        ),
        compiler_params=pltpu.CompilerParams(
            dimension_semantics=("parallel", "arbitrary")),
        cost_estimate=pl.CostEstimate(flops=flops,
                                      transcendentals=transcendentals,
                                      bytes_accessed=bytes_accessed),
    )(x_seq, w_qkv, b_qkv, w_o_t, b_o)

    # Kernel already wrote (B, E, S) (i.e. NCHW order); splitting S -> (H, W)
    # is a free reshape, so no post-kernel transpose pass over HBM is needed.
    return jnp.reshape(out_t, (B, E, H, W))


def init_params(key, embed_size):
    """Xavier-uniform weights stored as (in, out); zero biases (matches torch)."""
    E = embed_size
    bound = math.sqrt(6.0 / (E + E))
    ks = jax.random.split(key, 4)
    wq = jax.random.uniform(ks[0], (E, E), jnp.float32, -bound, bound)
    wk = jax.random.uniform(ks[1], (E, E), jnp.float32, -bound, bound)
    wv = jax.random.uniform(ks[2], (E, E), jnp.float32, -bound, bound)
    wo = jax.random.uniform(ks[3], (E, E), jnp.float32, -bound, bound)
    bq = jnp.zeros((E,), jnp.float32)
    bk = jnp.zeros((E,), jnp.float32)
    bv = jnp.zeros((E,), jnp.float32)
    bo = jnp.zeros((E,), jnp.float32)
    return (wq, wk, wv, wo, bq, bk, bv, bo)


def _reference(x, params, num_heads):
    """Pure-JAX all-f32 reference mirroring the PyTorch forward."""
    wq, wk, wv, wo, bq, bk, bv, bo = params
    B, C, H, W = x.shape
    E, S, D = C, H * W, C // num_heads
    xs = jnp.reshape(x, (B, S, E))

    def split(t):  # (B,S,E) -> (B,nh,S,D)
        return jnp.transpose(jnp.reshape(t, (B, S, num_heads, D)), (0, 2, 1, 3))

    q = split(xs @ wq + bq)
    k = split(xs @ wk + bk)
    v = split(xs @ wv + bv)
    scores = jnp.einsum("bhqd,bhkd->bhqk", q, k) / math.sqrt(D)
    p = jax.nn.softmax(scores, axis=-1)
    a = jnp.einsum("bhqk,bhkd->bhqd", p, v)
    a = jnp.reshape(jnp.transpose(a, (0, 2, 1, 3)), (B, S, E))
    o = a @ wo + bo
    return jnp.transpose(jnp.reshape(o, (B, H, W, E)), (0, 3, 1, 2))


if __name__ == "__main__":
    # small shapes: batch=2, channels(=embed)=32, spatial=8x8 (seq=64), heads=4
    B, E, Hh, Ww = 2, 32, 8, 8
    NUM_HEADS = 4

    key = jax.random.PRNGKey(0)
    k_x, k_p = jax.random.split(key)
    x = jax.random.normal(k_x, (B, E, Hh, Ww), jnp.float32)
    params = init_params(k_p, E)

    out = multi_head_self_attention(x, params, NUM_HEADS)
    out = jax.block_until_ready(out)

    ref = _reference(x, params, NUM_HEADS)
    assert out.shape == (B, E, Hh, Ww)
    # bf16 MXU operands everywhere (f32 accumulation / softmax) => a few 1e-2
    # of absolute deviation vs the all-f32 reference is expected; structural
    # bugs would show O(0.5+) errors.
    max_err = float(jnp.max(jnp.abs(out - ref)))
    assert max_err < 2e-1, f"max abs err {max_err}"
    print("KERNEL_OK")
</pallas_src>

<mosaic_0001>
module attributes {stable_mosaic.version = 11 : i64} {
  func.func @_mhsa_kernel(%arg0: i32, %arg1: i32, %arg2: memref<1x64x32xbf16, #tpu.memory_space<vmem>>, %arg3: memref<1x32x100xbf16, #tpu.memory_space<vmem>>, %arg4: memref<1x1x100xf32, #tpu.memory_space<vmem>>, %arg5: memref<1x32x32xbf16, #tpu.memory_space<vmem>>, %arg6: memref<32x1xf32, #tpu.memory_space<vmem>>, %arg7: memref<1x32x64xf32, #tpu.memory_space<vmem>>, %arg8: memref<32x64xf32, #tpu.memory_space<vmem>>) attributes {dimension_semantics = [#tpu.dimension_semantics<parallel>, #tpu.dimension_semantics<arbitrary>], iteration_bounds = array<i64: 2, 1>, scalar_prefetch = 0 : i64, scratch_operands = 1 : i64, tpu.core_type = #tpu.core_type<tc>, window_params = [{transform_indices = @transform_0, window_bounds = array<i64: 1, 64, 32>}, {pipeline_mode = #tpu.pipeline_mode<synchronous>, transform_indices = @transform_1, window_bounds = array<i64: 1, 32, 100>}, {pipeline_mode = #tpu.pipeline_mode<synchronous>, transform_indices = @transform_2, window_bounds = array<i64: 1, 1, 100>}, {pipeline_mode = #tpu.pipeline_mode<synchronous>, transform_indices = @transform_3, window_bounds = array<i64: 1, 32, 32>}, {pipeline_mode = #tpu.pipeline_mode<synchronous>, transform_indices = @transform_4, window_bounds = array<i64: 32, 1>}, {transform_indices = @transform_5, window_bounds = array<i64: 1, 32, 64>}]} {
    %c0 = arith.constant 0 : index
    %c0_0 = arith.constant 0 : index
    %c0_1 = arith.constant 0 : index
    %0 = vector.load %arg2[%c0, %c0_0, %c0_1] : memref<1x64x32xbf16, #tpu.memory_space<vmem>>, vector<1x64x32xbf16>
    %1 = vector.shape_cast %0 : vector<1x64x32xbf16> to vector<64x32xbf16>
    %2 = arith.index_cast %arg1 : i32 to index
    %c0_2 = arith.constant 0 : index
    %c0_3 = arith.constant 0 : index
    %3 = vector.load %arg3[%2, %c0_2, %c0_3] : memref<1x32x100xbf16, #tpu.memory_space<vmem>>, vector<1x32x100xbf16>
    %4 = vector.shape_cast %3 : vector<1x32x100xbf16> to vector<32x100xbf16>
    %cst = arith.constant dense<0.000000e+00> : vector<64x100xf32>
    %5 = tpu.matmul %1, %4, %cst {dimension_numbers = #tpu.dot_dimension_numbers<[1], [0], [0], [1], [0, 0, 1, 1], [], []>} : vector<64x32xbf16>, vector<32x100xbf16>, vector<64x100xf32> -> vector<64x100xf32>
    %6 = arith.index_cast %arg1 : i32 to index
    %c0_4 = arith.constant 0 : index
    %c0_5 = arith.constant 0 : index
    %7 = vector.load %arg4[%6, %c0_4, %c0_5] : memref<1x1x100xf32, #tpu.memory_space<vmem>>, vector<1x1x100xf32>
    %8 = vector.shape_cast %7 : vector<1x1x100xf32> to vector<1x100xf32>
    %9 = vector.broadcast %8 : vector<1x100xf32> to vector<64x100xf32>
    %10 = arith.addf %5, %9 : vector<64x100xf32>
    %11 = arith.truncf %10 : vector<64x100xf32> to vector<64x100xbf16>
    %12 = vector.extract_strided_slice %11 {offsets = [0, 0], sizes = [64, 8], strides = [1, 1]} : vector<64x100xbf16> to vector<64x8xbf16>
    %13 = vector.extract_strided_slice %11 {offsets = [0, 32], sizes = [64, 8], strides = [1, 1]} : vector<64x100xbf16> to vector<64x8xbf16>
    %14 = vector.extract_strided_slice %11 {offsets = [0, 64], sizes = [64, 9], strides = [1, 1]} : vector<64x100xbf16> to vector<64x9xbf16>
    %cst_6 = arith.constant dense<0.000000e+00> : vector<64x64xf32>
    %15 = tpu.matmul %12, %13, %cst_6 {dimension_numbers = #tpu.dot_dimension_numbers<[1], [1], [0], [0], [0, 0, 1, 0], [], []>} : vector<64x8xbf16>, vector<64x8xbf16>, vector<64x64xf32> -> vector<64x64xf32>
    %cst_7 = arith.constant dense<0xFF800000> : vector<64xf32>
    %16 = vector.multi_reduction <maximumf>, %15, %cst_7 [1] : vector<64x64xf32> to vector<64xf32>
    %17 = vector.shape_cast %16 : vector<64xf32> to vector<64x1xf32>
    %18 = vector.broadcast %17 : vector<64x1xf32> to vector<64x64xf32>
    %19 = arith.subf %15, %18 : vector<64x64xf32>
    %20 = math.exp %19 : vector<64x64xf32>
    %21 = arith.truncf %20 : vector<64x64xf32> to vector<64x64xbf16>
    %cst_8 = arith.constant dense<0.000000e+00> : vector<64x9xf32>
    %22 = tpu.matmul %21, %14, %cst_8 {dimension_numbers = #tpu.dot_dimension_numbers<[1], [0], [0], [1], [0, 0, 1, 1], [], []>} : vector<64x64xbf16>, vector<64x9xbf16>, vector<64x9xf32> -> vector<64x9xf32>
    %23 = vector.extract_strided_slice %22 {offsets = [0, 0], sizes = [64, 8], strides = [1, 1]} : vector<64x9xf32> to vector<64x8xf32>
    %24 = vector.extract_strided_slice %22 {offsets = [0, 8], sizes = [64, 1], strides = [1, 1]} : vector<64x9xf32> to vector<64x1xf32>
    %25 = tpu.reciprocal %24 {approx = true} : vector<64x1xf32> -> vector<64x1xf32>
    %26 = vector.broadcast %25 : vector<64x1xf32> to vector<64x8xf32>
    %27 = arith.mulf %23, %26 : vector<64x8xf32>
    %28 = arith.truncf %27 : vector<64x8xf32> to vector<64x8xbf16>
    %29 = vector.extract_strided_slice %11 {offsets = [0, 8], sizes = [64, 8], strides = [1, 1]} : vector<64x100xbf16> to vector<64x8xbf16>
    %30 = vector.extract_strided_slice %11 {offsets = [0, 40], sizes = [64, 8], strides = [1, 1]} : vector<64x100xbf16> to vector<64x8xbf16>
    %31 = vector.extract_strided_slice %11 {offsets = [0, 73], sizes = [64, 9], strides = [1, 1]} : vector<64x100xbf16> to vector<64x9xbf16>
    %cst_9 = arith.constant dense<0.000000e+00> : vector<64x64xf32>
    %32 = tpu.matmul %29, %30, %cst_9 {dimension_numbers = #tpu.dot_dimension_numbers<[1], [1], [0], [0], [0, 0, 1, 0], [], []>} : vector<64x8xbf16>, vector<64x8xbf16>, vector<64x64xf32> -> vector<64x64xf32>
    %cst_10 = arith.constant dense<0xFF800000> : vector<64xf32>
    %33 = vector.multi_reduction <maximumf>, %32, %cst_10 [1] : vector<64x64xf32> to vector<64xf32>
    %34 = vector.shape_cast %33 : vector<64xf32> to vector<64x1xf32>
    %35 = vector.broadcast %34 : vector<64x1xf32> to vector<64x64xf32>
    %36 = arith.subf %32, %35 : vector<64x64xf32>
    %37 = math.exp %36 : vector<64x64xf32>
    %38 = arith.truncf %37 : vector<64x64xf32> to vector<64x64xbf16>
    %cst_11 = arith.constant dense<0.000000e+00> : vector<64x9xf32>
    %39 = tpu.matmul %38, %31, %cst_11 {dimension_numbers = #tpu.dot_dimension_numbers<[1], [0], [0], [1], [0, 0, 1, 1], [], []>} : vector<64x64xbf16>, vector<64x9xbf16>, vector<64x9xf32> -> vector<64x9xf32>
    %40 = vector.extract_strided_slice %39 {offsets = [0, 0], sizes = [64, 8], strides = [1, 1]} : vector<64x9xf32> to vector<64x8xf32>
    %41 = vector.extract_strided_slice %39 {offsets = [0, 8], sizes = [64, 1], strides = [1, 1]} : vector<64x9xf32> to vector<64x1xf32>
    %42 = tpu.reciprocal %41 {approx = true} : vector<64x1xf32> -> vector<64x1xf32>
    %43 = vector.broadcast %42 : vector<64x1xf32> to vector<64x8xf32>
    %44 = arith.mulf %40, %43 : vector<64x8xf32>
    %45 = arith.truncf %44 : vector<64x8xf32> to vector<64x8xbf16>
    %46 = vector.extract_strided_slice %11 {offsets = [0, 16], sizes = [64, 8], strides = [1, 1]} : vector<64x100xbf16> to vector<64x8xbf16>
    %47 = vector.extract_strided_slice %11 {offsets = [0, 48], sizes = [64, 8], strides = [1, 1]} : vector<64x100xbf16> to vector<64x8xbf16>
    %48 = vector.extract_strided_slice %11 {offsets = [0, 82], sizes = [64, 9], strides = [1, 1]} : vector<64x100xbf16> to vector<64x9xbf16>
    %cst_12 = arith.constant dense<0.000000e+00> : vector<64x64xf32>
    %49 = tpu.matmul %46, %47, %cst_12 {dimension_numbers = #tpu.dot_dimension_numbers<[1], [1], [0], [0], [0, 0, 1, 0], [], []>} : vector<64x8xbf16>, vector<64x8xbf16>, vector<64x64xf32> -> vector<64x64xf32>
    %cst_13 = arith.constant dense<0xFF800000> : vector<64xf32>
    %50 = vector.multi_reduction <maximumf>, %49, %cst_13 [1] : vector<64x64xf32> to vector<64xf32>
    %51 = vector.shape_cast %50 : vector<64xf32> to vector<64x1xf32>
    %52 = vector.broadcast %51 : vector<64x1xf32> to vector<64x64xf32>
    %53 = arith.subf %49, %52 : vector<64x64xf32>
    %54 = math.exp %53 : vector<64x64xf32>
    %55 = arith.truncf %54 : vector<64x64xf32> to vector<64x64xbf16>
    %cst_14 = arith.constant dense<0.000000e+00> : vector<64x9xf32>
    %56 = tpu.matmul %55, %48, %cst_14 {dimension_numbers = #tpu.dot_dimension_numbers<[1], [0], [0], [1], [0, 0, 1, 1], [], []>} : vector<64x64xbf16>, vector<64x9xbf16>, vector<64x9xf32> -> vector<64x9xf32>
    %57 = vector.extract_strided_slice %56 {offsets = [0, 0], sizes = [64, 8], strides = [1, 1]} : vector<64x9xf32> to vector<64x8xf32>
    %58 = vector.extract_strided_slice %56 {offsets = [0, 8], sizes = [64, 1], strides = [1, 1]} : vector<64x9xf32> to vector<64x1xf32>
    %59 = tpu.reciprocal %58 {approx = true} : vector<64x1xf32> -> vector<64x1xf32>
    %60 = vector.broadcast %59 : vector<64x1xf32> to vector<64x8xf32>
    %61 = arith.mulf %57, %60 : vector<64x8xf32>
    %62 = arith.truncf %61 : vector<64x8xf32> to vector<64x8xbf16>
    %63 = vector.extract_strided_slice %11 {offsets = [0, 24], sizes = [64, 8], strides = [1, 1]} : vector<64x100xbf16> to vector<64x8xbf16>
    %64 = vector.extract_strided_slice %11 {offsets = [0, 56], sizes = [64, 8], strides = [1, 1]} : vector<64x100xbf16> to vector<64x8xbf16>
    %65 = vector.extract_strided_slice %11 {offsets = [0, 91], sizes = [64, 9], strides = [1, 1]} : vector<64x100xbf16> to vector<64x9xbf16>
    %cst_15 = arith.constant dense<0.000000e+00> : vector<64x64xf32>
    %66 = tpu.matmul %63, %64, %cst_15 {dimension_numbers = #tpu.dot_dimension_numbers<[1], [1], [0], [0], [0, 0, 1, 0], [], []>} : vector<64x8xbf16>, vector<64x8xbf16>, vector<64x64xf32> -> vector<64x64xf32>
    %cst_16 = arith.constant dense<0xFF800000> : vector<64xf32>
    %67 = vector.multi_reduction <maximumf>, %66, %cst_16 [1] : vector<64x64xf32> to vector<64xf32>
    %68 = vector.shape_cast %67 : vector<64xf32> to vector<64x1xf32>
    %69 = vector.broadcast %68 : vector<64x1xf32> to vector<64x64xf32>
    %70 = arith.subf %66, %69 : vector<64x64xf32>
    %71 = math.exp %70 : vector<64x64xf32>
    %72 = arith.truncf %71 : vector<64x64xf32> to vector<64x64xbf16>
    %cst_17 = arith.constant dense<0.000000e+00> : vector<64x9xf32>
    %73 = tpu.matmul %72, %65, %cst_17 {dimension_numbers = #tpu.dot_dimension_numbers<[1], [0], [0], [1], [0, 0, 1, 1], [], []>} : vector<64x64xbf16>, vector<64x9xbf16>, vector<64x9xf32> -> vector<64x9xf32>
    %74 = vector.extract_strided_slice %73 {offsets = [0, 0], sizes = [64, 8], strides = [1, 1]} : vector<64x9xf32> to vector<64x8xf32>
    %75 = vector.extract_strided_slice %73 {offsets = [0, 8], sizes = [64, 1], strides = [1, 1]} : vector<64x9xf32> to vector<64x1xf32>
    %76 = tpu.reciprocal %75 {approx = true} : vector<64x1xf32> -> vector<64x1xf32>
    %77 = vector.broadcast %76 : vector<64x1xf32> to vector<64x8xf32>
    %78 = arith.mulf %74, %77 : vector<64x8xf32>
    %79 = arith.truncf %78 : vector<64x8xf32> to vector<64x8xbf16>
    %80 = tpu.concatenate %28, %45, %62, %79 in 1 : vector<64x8xbf16>, vector<64x8xbf16>, vector<64x8xbf16>, vector<64x8xbf16> -> vector<64x32xbf16>
    %81 = arith.index_cast %arg1 : i32 to index
    %c0_18 = arith.constant 0 : index
    %c0_19 = arith.constant 0 : index
    %82 = vector.load %arg5[%81, %c0_18, %c0_19] : memref<1x32x32xbf16, #tpu.memory_space<vmem>>, vector<1x32x32xbf16>
    %83 = vector.shape_cast %82 : vector<1x32x32xbf16> to vector<32x32xbf16>
    %cst_20 = arith.constant dense<0.000000e+00> : vector<32x64xf32>
    %84 = tpu.matmul %83, %80, %cst_20 {dimension_numbers = #tpu.dot_dimension_numbers<[1], [1], [0], [0], [0, 0, 1, 0], [], []>} : vector<32x32xbf16>, vector<64x32xbf16>, vector<32x64xf32> -> vector<32x64xf32>
    %c0_i32 = arith.constant 0 : i32
    %85 = arith.cmpi eq, %arg1, %c0_i32 : i32
    %86 = arith.extui %85 : i1 to i32
    %c0_i32_21 = arith.constant 0 : i32
    %87 = arith.cmpi ne, %86, %c0_i32_21 : i32
    scf.if %87 {
      %cst_28 = arith.constant 0.000000e+00 : f32
      %94 = vector.broadcast %cst_28 : f32 to vector<32x64xf32>
      %c0_29 = arith.constant 0 : index
      %c0_30 = arith.constant 0 : index
      %95 = vector.load %arg8[%c0_29, %c0_30] : memref<32x64xf32, #tpu.memory_space<vmem>>, vector<32x64xf32>
      tpu.vector_store %arg8[%c0_29, %c0_30], %94 {strides = array<i32>} : memref<32x64xf32, #tpu.memory_space<vmem>>, vector<32x64xf32>,
    } else {
    }
    %c0_22 = arith.constant 0 : index
    %c0_23 = arith.constant 0 : index
    %88 = vector.load %arg8[%c0_22, %c0_23] : memref<32x64xf32, #tpu.memory_space<vmem>>, vector<32x64xf32>
    %89 = arith.addf %88, %84 : vector<32x64xf32>
    %c0_24 = arith.constant 0 : index
    %c0_25 = arith.constant 0 : index
    %90 = vector.load %arg8[%c0_24, %c0_25] : memref<32x64xf32, #tpu.memory_space<vmem>>, vector<32x64xf32>
    tpu.vector_store %arg8[%c0_24, %c0_25], %89 {strides = array<i32>} : memref<32x64xf32, #tpu.memory_space<vmem>>, vector<32x64xf32>,
    %c0_i32_26 = arith.constant 0 : i32
    %91 = arith.cmpi eq, %arg1, %c0_i32_26 : i32
    %92 = arith.extui %91 : i1 to i32
    %c0_i32_27 = arith.constant 0 : i32
    %93 = arith.cmpi ne, %92, %c0_i32_27 : i32
    scf.if %93 {
      %c0_28 = arith.constant 0 : index
      %c0_29 = arith.constant 0 : index
      %94 = vector.load %arg8[%c0_28, %c0_29] : memref<32x64xf32, #tpu.memory_space<vmem>>, vector<32x64xf32>
      %c0_30 = arith.constant 0 : index
      %c0_31 = arith.constant 0 : index
      %95 = vector.load %arg6[%c0_30, %c0_31] : memref<32x1xf32, #tpu.memory_space<vmem>>, vector<32x1xf32>
      %96 = vector.broadcast %95 : vector<32x1xf32> to vector<32x64xf32>
      %97 = arith.addf %94, %96 : vector<32x64xf32>
      %c0_32 = arith.constant 0 : index
      %c0_33 = arith.constant 0 : index
      %c0_34 = arith.constant 0 : index
      %98 = vector.load %arg7[%c0_32, %c0_33, %c0_34] : memref<1x32x64xf32, #tpu.memory_space<vmem>>, vector<1x32x64xf32>
      %99 = vector.shape_cast %98 : vector<1x32x64xf32> to vector<32x64xf32>
      %100 = vector.shape_cast %97 : vector<32x64xf32> to vector<1x32x64xf32>
      tpu.vector_store %arg7[%c0_32, %c0_33, %c0_34], %100 {strides = array<i32>} : memref<1x32x64xf32, #tpu.memory_space<vmem>>, vector<1x32x64xf32>,
    } else {
    }
    return
  }
  func.func @transform_0(%arg0: i32, %arg1: i32) -> (i32, i32, i32) {
    %c0_i32 = arith.constant 0 : i32
    %c0_i32_0 = arith.constant 0 : i32
    %c0_i32_1 = arith.constant 0 : i32
    return %arg0, %c0_i32, %c0_i32_0 : i32, i32, i32
  }
  func.func @transform_1(%arg0: i32, %arg1: i32) -> (i32, i32, i32) {
    %c0_i32 = arith.constant 0 : i32
    %c0_i32_0 = arith.constant 0 : i32
    %c0_i32_1 = arith.constant 0 : i32
    %c0_i32_2 = arith.constant 0 : i32
    return %c0_i32, %c0_i32_0, %c0_i32_1 : i32, i32, i32
  }
  func.func @transform_2(%arg0: i32, %arg1: i32) -> (i32, i32, i32) {
    %c0_i32 = arith.constant 0 : i32
    %c0_i32_0 = arith.constant 0 : i32
    %c0_i32_1 = arith.constant 0 : i32
    %c0_i32_2 = arith.constant 0 : i32
    return %c0_i32, %c0_i32_0, %c0_i32_1 : i32, i32, i32
  }
  func.func @transform_3(%arg0: i32, %arg1: i32) -> (i32, i32, i32) {
    %c0_i32 = arith.constant 0 : i32
    %c0_i32_0 = arith.constant 0 : i32
    %c0_i32_1 = arith.constant 0 : i32
    %c0_i32_2 = arith.constant 0 : i32
    return %c0_i32, %c0_i32_0, %c0_i32_1 : i32, i32, i32
  }
  func.func @transform_4(%arg0: i32, %arg1: i32) -> (i32, i32) {
    %c0_i32 = arith.constant 0 : i32
    %c0_i32_0 = arith.constant 0 : i32
    %c0_i32_1 = arith.constant 0 : i32
    return %c0_i32, %c0_i32_0 : i32, i32
  }
  func.func @transform_5(%arg0: i32, %arg1: i32) -> (i32, i32, i32) {
    %c0_i32 = arith.constant 0 : i32
    %c0_i32_0 = arith.constant 0 : i32
    %c0_i32_1 = arith.constant 0 : i32
    return %arg0, %c0_i32, %c0_i32_0 : i32, i32, i32
  }
}

</mosaic_0001>

<llo_original>
// kernel: tpu_custom_call.1
$region0: #{tpu_custom_call.1}
  #allocation0 [shape = 'u32[]', space=smem, size = 0x4, offset = 0x4, fixed_abs, tag = 'smem constant byte address 0x4 - core index']
  #allocation1 [shape = 'u32[144,128]{1,0:T(1,128)}', space=vmem, size = 0x12000, scoped, tag = 'internal scratch']
  #allocation2 [shape = 'f32[32,64]{1,0:T(8,128)}', space=vmem, size = 0x4000, scoped, tag = 'scratch operand']
  %s0 = inlined_call_operand.vmem [shape: bf16[2,64,32], index: 0, kind: input, shape index: {}]
  %s1 = inlined_call_operand.vmem [shape: bf16[1,32,100], index: 1, kind: input, shape index: {}]
  %s2 = inlined_call_operand.vmem [shape: f32[1,1,100], index: 2, kind: input, shape index: {}]
  %s3 = inlined_call_operand.vmem [shape: bf16[1,32,32], index: 3, kind: input, shape index: {}]
  %s4 = inlined_call_operand.vmem [shape: f32[32,1], index: 4, kind: input, shape index: {}]
  %s5 = inlined_call_operand.hbm [shape: f32[2,32,64], index: 5, kind: output, shape index: {}]
  %s6 = sld [smem:[#allocation0]]
  $region61: #{tpu_custom_call.1} parent=0
    _
  %s8 = ssub.s32 1, %s6
  %s9 = scalar_select 0, %s8, %s6
  $region1: #{tpu_custom_call.1} parent=0
    #allocation3 [shape = 'u8[32768]{0}', space=vmem, size = 0x8000, scoped, tag = 'output window, operand 0']
    #allocation4 [shape = 's32[2]{0}', space=sflag, size = 0x8, scoped, tag = 'scoped memory for tpu_custom_call.1']
    %10 = vsyncpa [#allocation4], 0
    %s11 = scalar_lea.sflag [#allocation4], 1
    %12 = vsyncpa %s11, 0
    loop: start=0, step=1, limit=4
    $region2: #{tpu_custom_call.1} parent=1 // loop_pre_header
      _
    $region3: #{tpu_custom_call.1} parent=1 // loop_header
      %s14 = sphi 0, %s18
      %p15 = scmp.ge.s32.totalorder %s14, 4
      %s21 = sphi 0, %s33
      %s22 = sphi 0, %s29
      %s23 = sphi 0, %s21
      %s24 = sphi 0, %s22
      %s25 = sphi 0, %s23
      %s26 = sphi 0, %s24
      %s36 = sphi 0, %s38
      %s39 = sphi 0, %s36
      %s40 = sphi 0, %s39
      %s56 = sphi 0, %s40
      %s60 = sphi 0, %s60
      %s62 = sphi 0, %s60
      %s63 = sphi 0, %s62
      %s77 = sphi 0, %s63
      %s81 = sphi 0, %s81
      %s83 = sphi 0, %s81
      %s84 = sphi 0, %s83
      %s98 = sphi 0, %s84
      %s102 = sphi 0, %s102
      %s104 = sphi 0, %s102
      %s105 = sphi 0, %s104
      %s119 = sphi 0, %s105
      %s123 = sphi 0, %s123
      %s125 = sphi 0, %s123
      %s126 = sphi 0, %s125
      %s140 = sphi 0, %s126
      %s146 = sphi 0, %s148
      %s149 = sphi 0, %s146
      %s150 = sphi 0, %s149
      %s166 = sphi 0, %s150
    $region4: #{tpu_custom_call.1} parent=1 // loop_header_branch
      %17 = sbr.rel (%p15) target = $region8
    $region5: #{tpu_custom_call.1} parent=1 // loop_body
      %s19 = ssub.s32 %s14, 1
      %s20 = ssub.s32 %s14, 2
      %s27 = sadd.s32 1, %s22
      %p28 = scmp.ge.s32.totalorder %s27, 1
      %s29 = scalar_select %p28, 0, %s27
      %s30 = sadd.s32 1, %s21
      %s31 = scalar_select %p28, %s30, %s21
      %p32 = scmp.ge.s32.totalorder %s31, 2
      %s33 = scalar_select %p32, 0, %s31
      %s34 = ssub.s32 %s21, %s33
      %p35 = scmp.eq.s32.totalorder %s34, 0
      %s37 = sadd.s32 %s36, 1
      %s38 = scalar_select %p35, %s36, %s37
      %p41 = pneg %p35
      %p42 = scmp.eq.s32.totalorder %s14, 1
      %p43 = por %p41, %p42
      %p44 = scmp.ne.s32.totalorder %s36, %s39
      %p45 = scmp.eq.s32.totalorder %s14, 0
      %p46 = por %p44, %p45
      %p47 = scmp.ne.s32.totalorder %s36, %s39
      %p48 = scmp.eq.s32.totalorder %s19, 1
      %p49 = por %p47, %p48
      %p50 = scmp.ne.s32.totalorder %s39, %s40
      %p51 = scmp.eq.s32.totalorder %s19, 0
      %p52 = por %p50, %p51
      %p53 = scmp.ne.s32.totalorder %s39, %s40
      %p54 = scmp.eq.s32.totalorder %s20, 1
      %p55 = por %p53, %p54
      %p57 = scmp.ne.s32.totalorder %s40, %s56
      %p58 = scmp.eq.s32.totalorder %s20, 0
      %p59 = por %p57, %p58
      %s61 = sadd.s32 %s60, 1
      %p64 = scmp.eq.s32.totalorder %s14, 1
      %p65 = scmp.ne.s32.totalorder %s60, %s62
      %p66 = scmp.eq.s32.totalorder %s14, 0
      %p67 = por %p65, %p66
      %p68 = scmp.ne.s32.totalorder %s60, %s62
      %p69 = scmp.eq.s32.totalorder %s19, 1
      %p70 = por %p68, %p69
      %p71 = scmp.ne.s32.totalorder %s62, %s63
      %p72 = scmp.eq.s32.totalorder %s19, 0
      %p73 = por %p71, %p72
      %p74 = scmp.ne.s32.totalorder %s62, %s63
      %p75 = scmp.eq.s32.totalorder %s20, 1
      %p76 = por %p74, %p75
      %p78 = scmp.ne.s32.totalorder %s63, %s77
      %p79 = scmp.eq.s32.totalorder %s20, 0
      %p80 = por %p78, %p79
      %s82 = sadd.s32 %s81, 1
      %p85 = scmp.eq.s32.totalorder %s14, 1
      %p86 = scmp.ne.s32.totalorder %s81, %s83
      %p87 = scmp.eq.s32.totalorder %s14, 0
      %p88 = por %p86, %p87
      %p89 = scmp.ne.s32.totalorder %s81, %s83
      %p90 = scmp.eq.s32.totalorder %s19, 1
      %p91 = por %p89, %p90
      %p92 = scmp.ne.s32.totalorder %s83, %s84
      %p93 = scmp.eq.s32.totalorder %s19, 0
      %p94 = por %p92, %p93
      %p95 = scmp.ne.s32.totalorder %s83, %s84
      %p96 = scmp.eq.s32.totalorder %s20, 1
      %p97 = por %p95, %p96
      %p99 = scmp.ne.s32.totalorder %s84, %s98
      %p100 = scmp.eq.s32.totalorder %s20, 0
      %p101 = por %p99, %p100
      %s103 = sadd.s32 %s102, 1
      %p106 = scmp.eq.s32.totalorder %s14, 1
      %p107 = scmp.ne.s32.totalorder %s102, %s104
      %p108 = scmp.eq.s32.totalorder %s14, 0
      %p109 = por %p107, %p108
      %p110 = scmp.ne.s32.totalorder %s102, %s104
      %p111 = scmp.eq.s32.totalorder %s19, 1
      %p112 = por %p110, %p111
      %p113 = scmp.ne.s32.totalorder %s104, %s105
      %p114 = scmp.eq.s32.totalorder %s19, 0
      %p115 = por %p113, %p114
      %p116 = scmp.ne.s32.totalorder %s104, %s105
      %p117 = scmp.eq.s32.totalorder %s20, 1
      %p118 = por %p116, %p117
      %p120 = scmp.ne.s32.totalorder %s105, %s119
      %p121 = scmp.eq.s32.totalorder %s20, 0
      %p122 = por %p120, %p121
      %s124 = sadd.s32 %s123, 1
      %p127 = scmp.eq.s32.totalorder %s14, 1
      %p128 = scmp.ne.s32.totalorder %s123, %s125
      %p129 = scmp.eq.s32.totalorder %s14, 0
      %p130 = por %p128, %p129
      %p131 = scmp.ne.s32.totalorder %s123, %s125
      %p132 = scmp.eq.s32.totalorder %s19, 1
      %p133 = por %p131, %p132
      %p134 = scmp.ne.s32.totalorder %s125, %s126
      %p135 = scmp.eq.s32.totalorder %s19, 0
      %p136 = por %p134, %p135
      %p137 = scmp.ne.s32.totalorder %s125, %s126
      %p138 = scmp.eq.s32.totalorder %s20, 1
      %p139 = por %p137, %p138
      %p141 = scmp.ne.s32.totalorder %s126, %s140
      %p142 = scmp.eq.s32.totalorder %s20, 0
      %p143 = por %p141, %p142
      %s144 = ssub.s32 %s21, %s33
      %p145 = scmp.eq.s32.totalorder %s144, 0
      %s147 = sadd.s32 %s146, 1
      %s148 = scalar_select %p145, %s146, %s147
      %p151 = pneg %p145
      %p152 = scmp.eq.s32.totalorder %s14, 1
      %p153 = por %p151, %p152
      %p154 = scmp.ne.s32.totalorder %s146, %s149
      %p155 = scmp.eq.s32.totalorder %s14, 0
      %p156 = por %p154, %p155
      %p157 = scmp.ne.s32.totalorder %s146, %s149
      %p158 = scmp.eq.s32.totalorder %s19, 1
      %p159 = por %p157, %p158
      %p160 = scmp.ne.s32.totalorder %s149, %s150
      %p161 = scmp.eq.s32.totalorder %s19, 0
      %p162 = por %p160, %p161
      %p163 = scmp.ne.s32.totalorder %s149, %s150
      %p164 = scmp.eq.s32.totalorder %s20, 1
      %p165 = por %p163, %p164
      %p167 = scmp.ne.s32.totalorder %s150, %s166
      %p168 = scmp.eq.s32.totalorder %s20, 0
      %p169 = por %p167, %p168
      %p170 = scmp.le.s32.totalorder 1, %s14
      %p171 = scmp.lt.s32.totalorder %s14, 3
      %p172 = pnand %p170, %p171
      %p173 = pneg %p172
      // Predicated region
      $region9: #{tpu_custom_call.1} parent=5 // pred_check
        _
      $region10: #{tpu_custom_call.1} parent=5 // pred_check_branch
        %175 = sbr.rel (%p172) target = $region12
      $region11: #{tpu_custom_call.1} parent=5 // pred_region
        %s176 = ssub.s32 %s14, 1
        // Predicated region
        $region13: #{tpu_custom_call.1} parent=11 // pred_check
          %p177 = pneg %p73
        $region14: #{tpu_custom_call.1} parent=11 // pred_check_branch
          %179 = sbr.rel (%p177) target = $region16
        $region15: #{tpu_custom_call.1} parent=11 // pred_region
          _
        $region16: #{tpu_custom_call.1} parent=11 // pred_fallthru
          _
        // Predicated region
        $region17: #{tpu_custom_call.1} parent=11 // pred_check
          %p180 = pneg %p94
        $region18: #{tpu_custom_call.1} parent=11 // pred_check_branch
          %182 = sbr.rel (%p180) target = $region20
        $region19: #{tpu_custom_call.1} parent=11 // pred_region
          _
        $region20: #{tpu_custom_call.1} parent=11 // pred_fallthru
          _
        // Predicated region
        $region21: #{tpu_custom_call.1} parent=11 // pred_check
          %p183 = pneg %p115
        $region22: #{tpu_custom_call.1} parent=11 // pred_check_branch
          %185 = sbr.rel (%p183) target = $region24
        $region23: #{tpu_custom_call.1} parent=11 // pred_region
          _
        $region24: #{tpu_custom_call.1} parent=11 // pred_fallthru
          _
        // Predicated region
        $region25: #{tpu_custom_call.1} parent=11 // pred_check
          %p186 = pneg %p136
        $region26: #{tpu_custom_call.1} parent=11 // pred_check_branch
          %188 = sbr.rel (%p186) target = $region28
        $region27: #{tpu_custom_call.1} parent=11 // pred_region
          _
        $region28: #{tpu_custom_call.1} parent=11 // pred_fallthru
          _
      $region12: #{tpu_custom_call.1} parent=5 // pred_fallthru
        _
      %p189 = scmp.lt.s32.totalorder %s14, 2
      // Predicated region
      $region29: #{tpu_custom_call.1} parent=5 // pred_check
        %p190 = pneg %p189
      $region30: #{tpu_custom_call.1} parent=5 // pred_check_branch
        %192 = sbr.rel (%p190) target = $region32
      $region31: #{tpu_custom_call.1} parent=5 // pred_region
        // Predicated region
        $region33: #{tpu_custom_call.1} parent=31 // pred_check
          %p193 = pneg %p46
        $region34: #{tpu_custom_call.1} parent=31 // pred_check_branch
          %195 = sbr.rel (%p193) target = $region36
        $region35: #{tpu_custom_call.1} parent=31 // pred_region
          %p196 = scmp.lt.s32.totalorder %s21, 1
          %s197 = scalar_select %p196, %s21, 1
          %s198 = smul.addr %s197, 8
          %s199 = smul.addr %s198, 4
          %s200 = scalar_lea.vmem %s0, %s199
        $region36: #{tpu_custom_call.1} parent=31 // pred_fallthru
          _
      $region32: #{tpu_custom_call.1} parent=5 // pred_fallthru
        _
      %p201 = scmp.le.s32.totalorder 1, %s14
      %p202 = scmp.lt.s32.totalorder %s14, 3
      %p203 = pnand %p201, %p202
      %p204 = pneg %p203
      // Predicated region
      $region37: #{tpu_custom_call.1} parent=5 // pred_check
        _
      $region38: #{tpu_custom_call.1} parent=5 // pred_check_branch
        %206 = sbr.rel (%p203) target = $region40
      $region39: #{tpu_custom_call.1} parent=5 // pred_region
        %s207 = ssub.s32 %s14, 1
        %p208 = scmp.lt.s32.totalorder %s23, 1
        %s209 = scalar_select %p208, %s23, 1
        %s210 = smul.addr %s209, 8
        %s211 = smul.addr %s210, 4
        %s212 = scalar_lea.vmem %s0, %s211
        %p213 = pneg %p52
        %p214 = pneg %p49
        %p215 = pneg %p73
        %p216 = pneg %p70
        %p217 = pneg %p94
        %p218 = pneg %p91
        %p219 = pneg %p115
        %p220 = pneg %p112
        %p221 = pneg %p136
        %p222 = pneg %p133
        %p223 = pneg %p162
        %p224 = pneg %p159
        %s225 = sand.u32 %s149, 1
        %s226 = scalar_lea.sflag [#allocation4], %s225
        %s227 = sand.u32 %s149, 1
        %s228 = smul.addr %s227, 32
        %s229 = scalar_lea.vmem [#allocation3], %s228
        %p230 = scmp.lt.s32.totalorder %s23, 1
        %s231 = scalar_select %p230, %s23, 1
        %s232 = smul.addr %s231, 8
        %s233 = smul.addr %s232, 4
        %s234 = scalar_lea.vmem %s0, %s233
        %v236 = vld [vmem:[%s234] sm:$0xf]
        %v237 = vld [vmem:[%s234 + $0x4] sm:$0xf]
        %v238 = vld [vmem:[%s234 + $0x8] sm:$0xf]
        %v239 = vld [vmem:[%s234 + $0xc] sm:$0xf]
        %v240 = vld [vmem:[%s234 + $0x10] sm:$0xf]
        %v241 = vld [vmem:[%s234 + $0x14] sm:$0xf]
        %v242 = vld [vmem:[%s234 + $0x18] sm:$0xf]
        %v243 = vld [vmem:[%s234 + $0x1c] sm:$0xf]
        %s244 = smul.u32 %s24, 4
        %s245 = smul.addr %s244, 4
        %s246 = scalar_lea.vmem %s1, %s245
        %v247 = vld [vmem:[%s246] sm:$0xf]
        %v248 = vld [vmem:[%s246 + $0x4] sm:$0xf]
        %v249 = vld [vmem:[%s246 + $0x8] sm:$0xf]
        %v250 = vld [vmem:[%s246 + $0xc] sm:$0xf]
        %s251 = scalar_lea.vmem %s2, %s24
        %v252 = vld [vmem:[%s251] sm:$0x1]
        %v254 = vlaneseq
        %v255 = vshrl.u32 %v254, 7
        %v256 = vsub.s32 0, %v255
        %v257 = vrot.slane %v252, %v256
        %v267 = vunpack.c.l.b16 %v236
        %v268 = vunpack.c.l.b16 %v237
        %v269 = vunpack.c.l.b16 %v238
        %v270 = vunpack.c.l.b16 %v239
        %v271 = vunpack.c.l.b16 %v240
        %v272 = vunpack.c.l.b16 %v241
        %v273 = vunpack.c.l.b16 %v242
        %v274 = vunpack.c.l.b16 %v243
        %v275 = vpack.c.b16 %v268, %v267
        %v276 = vpack.c.b16 %v270, %v269
        %v277 = vpack.c.b16 %v272, %v271
        %v278 = vpack.c.b16 %v274, %v273
        %v283 = vunpack.c.l.b16 %v247
        %v284 = vunpack.c.l.b16 %v248
        %v285 = vunpack.c.l.b16 %v249
        %v286 = vunpack.c.l.b16 %v250
        %v287 = vpack.c.b16 %v284, %v283
        %v288 = vpack.c.b16 %v286, %v285
        %vm291 = vcmask 261120
        %v293 = vsel %vm291, %v275, 0
        %v296 = vsel %vm291, %v276, 0
        %v299 = vsel %vm291, %v277, 0
        %v302 = vsel %vm291, %v278, 0
        %304 = vmatprep.subr.bf16.mxu0 0
        %305 = vmatpush1.bf16.msra.mxu0 %v287
        %306 = vmatprep.subr.bf16.mxu0 0
        %307 = vmatpush1.bf16.msra.mxu0 %v288
        %308 = vmatprep.subr.bf16.mxu0 0
        %309 = vmatpush1.bf16.msra.mxu0 0
        %310 = vmatprep.subr.bf16.mxu0 0
        %311 = vmatpush1.bf16.msra.mxu0 0
        %312 = vmatprep.subr.bf16.mxu0 0
        %313 = vmatpush1.bf16.msra.mxu0 0
        %314 = vmatprep.subr.bf16.mxu0 0
        %315 = vmatpush1.bf16.msra.mxu0 0
        %316 = vmatprep.subr.bf16.mxu0 0
        %317 = vmatpush1.bf16.msra.mxu0 0
        %318 = vmatprep.subr.bf16.mxu0 0
        %319 = vmatpush1.bf16.msra.mxu0 0
        %320 = vmatprep.subr.bf16.mxu0 0
        %321 = vmatpush1.bf16.msra.mxu0 0
        %322 = vmatprep.subr.bf16.mxu0 0
        %323 = vmatpush1.bf16.msra.mxu0 0
        %324 = vmatprep.subr.bf16.mxu0 0
        %325 = vmatpush1.bf16.msra.mxu0 0
        %326 = vmatprep.subr.bf16.mxu0 0
        %327 = vmatpush1.bf16.msra.mxu0 0
        %328 = vmatprep.subr.bf16.mxu0 0
        %329 = vmatpush1.bf16.msra.mxu0 0
        %330 = vmatprep.subr.bf16.mxu0 0
        %331 = vmatpush1.bf16.msra.mxu0 0
        %332 = vmatprep.subr.bf16.mxu0 0
        %333 = vmatpush1.bf16.msra.mxu0 0
        %334 = vmatprep.subr.bf16.mxu0 0
        %335 = vmatpush1.bf16.msra.mxu0 0
        %336 = vmatprep.mubr.bf16.mxu0 0
        %337 = vmatmul.mubr.bf16.gmra.mrb[0].mxu0 %v293
        %v338 = vpop.f32.mrb[0].mxu0
        %v339 = vadd.f32 %v257, %v338
        %v340 = vpop.f32.mrb[0].mxu0
        %v341 = vpop.f32.mrb[0].mxu0
        %v342 = vadd.f32 %v257, %v341
        %v343 = vpop.f32.mrb[0].mxu0
        %344 = vmatprep.mubr.bf16.mxu0 0
        %345 = vmatmul.mubr.bf16.gmra.mrb[0].mxu0 %v296
        %v346 = vpop.f32.mrb[0].mxu0
        %v347 = vadd.f32 %v257, %v346
        %v348 = vpop.f32.mrb[0].mxu0
        %v349 = vpop.f32.mrb[0].mxu0
        %v350 = vadd.f32 %v257, %v349
        %v351 = vpop.f32.mrb[0].mxu0
        %352 = vmatprep.mubr.bf16.mxu0 0
        %353 = vmatmul.mubr.bf16.gmra.mrb[0].mxu0 %v299
        %v354 = vpop.f32.mrb[0].mxu0
        %v355 = vadd.f32 %v257, %v354
        %v356 = vpop.f32.mrb[0].mxu0
        %v357 = vpop.f32.mrb[0].mxu0
        %v358 = vadd.f32 %v257, %v357
        %v359 = vpop.f32.mrb[0].mxu0
        %360 = vmatprep.mubr.bf16.mxu0 0
        %361 = vmatmul.mubr.bf16.gmra.mrb[0].mxu0 %v302
        %v362 = vpop.f32.mrb[0].mxu0
        %v363 = vadd.f32 %v257, %v362
        %v364 = vpop.f32.mrb[0].mxu0
        %v365 = vpop.f32.mrb[0].mxu0
        %v366 = vadd.f32 %v257, %v365
        %v367 = vpop.f32.mrb[0].mxu0
        %368 = vdwg.mxu0
        %v369 = vpack.c.bf16 %v342, %v339
        %v370 = vpack.c.bf16 %v350, %v347
        %v371 = vpack.c.bf16 %v358, %v355
        %v372 = vpack.c.bf16 %v366, %v363
        %377 = vrot.lane.b32.xlu0 %v369, 96
        %v378 = vpop.permute.xlu0 %377
        %379 = vrot.lane.b32.xlu0 %v370, 96
        %v380 = vpop.permute.xlu0 %379
        %381 = vrot.lane.b32.xlu0 %v371, 96
        %v382 = vpop.permute.xlu0 %381
        %383 = vrot.lane.b32.xlu0 %v372, 96
        %v384 = vpop.permute.xlu0 %383
        %vm385 = vcmask 64512
        %v387 = vsel %vm385, %v369, 0
        %v390 = vsel %vm385, %v370, 0
        %v393 = vsel %vm385, %v371, 0
        %v396 = vsel %vm385, %v372, 0
        %v399 = vsel %vm385, %v378, 0
        %v402 = vsel %vm385, %v380, 0
        %v405 = vsel %vm385, %v382, 0
        %v408 = vsel %vm385, %v384, 0
        %410 = vmatprep.subr.bf16.mxu0 0
        %411 = vmatpush1.bf16.xpose.msra.mxu0 %v399
        %412 = vmatprep.subr.bf16.mxu0 0
        %413 = vmatpush1.bf16.xpose.msra.mxu0 %v402
        %414 = vmatprep.subr.bf16.mxu0 0
        %415 = vmatpush1.bf16.xpose.msra.mxu0 %v405
        %416 = vmatprep.subr.bf16.mxu0 0
        %417 = vmatpush1.bf16.xpose.msra.mxu0 %v408
        %418 = vmatprep.subr.bf16.mxu0 0
        %419 = vmatpush1.bf16.xpose.msra.mxu0 0
        %420 = vmatprep.subr.bf16.mxu0 0
        %421 = vmatpush1.bf16.xpose.msra.mxu0 0
        %422 = vmatprep.subr.bf16.mxu0 0
        %423 = vmatpush1.bf16.xpose.msra.mxu0 0
        %424 = vmatprep.subr.bf16.mxu0 0
        %425 = vmatpush1.bf16.xpose.msra.mxu0 0
        %426 = vmatprep.subr.bf16.mxu0 0
        %427 = vmatpush1.bf16.xpose.msra.mxu0 0
        %428 = vmatprep.subr.bf16.mxu0 0
        %429 = vmatpush1.bf16.xpose.msra.mxu0 0
        %430 = vmatprep.subr.bf16.mxu0 0
        %431 = vmatpush1.bf16.xpose.msra.mxu0 0
        %432 = vmatprep.subr.bf16.mxu0 0
        %433 = vmatpush1.bf16.xpose.msra.mxu0 0
        %434 = vmatprep.subr.bf16.mxu0 0
        %435 = vmatpush1.bf16.xpose.msra.mxu0 0
        %436 = vmatprep.subr.bf16.mxu0 0
        %437 = vmatpush1.bf16.xpose.msra.mxu0 0
        %438 = vmatprep.subr.bf16.mxu0 0
        %439 = vmatpush1.bf16.xpose.msra.mxu0 0
        %440 = vmatprep.subr.bf16.mxu0 0
        %441 = vmatpush1.bf16.xpose.msra.mxu0 0
        %442 = vmatprep.mubr.bf16.mxu0 0
        %443 = vmatmul.mubr.bf16.gmra.mrb[0].mxu0 %v387
        %v444 = vpop.f32.mrb[0].mxu0
        %v445 = vadd.f32 0.0, %v444
        %v446 = vpop.f32.mrb[0].mxu0
        %v447 = vpop.f32.mrb[0].mxu0
        %v448 = vadd.f32 0.0, %v447
        %v449 = vpop.f32.mrb[0].mxu0
        %450 = vmatprep.mubr.bf16.mxu0 0
        %451 = vmatmul.mubr.bf16.gmra.mrb[0].mxu0 %v390
        %v452 = vpop.f32.mrb[0].mxu0
        %v453 = vadd.f32 0.0, %v452
        %v454 = vpop.f32.mrb[0].mxu0
        %v455 = vpop.f32.mrb[0].mxu0
        %v456 = vadd.f32 0.0, %v455
        %v457 = vpop.f32.mrb[0].mxu0
        %458 = vmatprep.mubr.bf16.mxu0 0
        %459 = vmatmul.mubr.bf16.gmra.mrb[0].mxu0 %v393
        %v460 = vpop.f32.mrb[0].mxu0
        %v461 = vadd.f32 0.0, %v460
        %v462 = vpop.f32.mrb[0].mxu0
        %v463 = vpop.f32.mrb[0].mxu0
        %v464 = vadd.f32 0.0, %v463
        %v465 = vpop.f32.mrb[0].mxu0
        %466 = vmatprep.mubr.bf16.mxu0 0
        %467 = vmatmul.mubr.bf16.gmra.mrb[0].mxu0 %v396
        %v468 = vpop.f32.mrb[0].mxu0
        %v469 = vadd.f32 0.0, %v468
        %v470 = vpop.f32.mrb[0].mxu0
        %v471 = vpop.f32.mrb[0].mxu0
        %v472 = vadd.f32 0.0, %v471
        %v473 = vpop.f32.mrb[0].mxu0
        %474 = vdwg.mxu0
        %vm475 = vcmask 523264
        %v476 = vsel %vm475, %v445, -inf
        %477 = vmax.xlane.f32.xlu0 %v476
        %v478 = vpop.xlane.xlu0 %477
        %v479 = vsel %vm475, %v448, -inf
        %480 = vmax.xlane.f32.xlu0 %v479
        %v481 = vpop.xlane.xlu0 %480
        %v482 = vsel %vm475, %v453, -inf
        %483 = vmax.xlane.f32.xlu0 %v482
        %v484 = vpop.xlane.xlu0 %483
        %v485 = vsel %vm475, %v456, -inf
        %486 = vmax.xlane.f32.xlu0 %v485
        %v487 = vpop.xlane.xlu0 %486
        %v488 = vsel %vm475, %v461, -inf
        %489 = vmax.xlane.f32.xlu0 %v488
        %v490 = vpop.xlane.xlu0 %489
        %v491 = vsel %vm475, %v464, -inf
        %492 = vmax.xlane.f32.xlu0 %v491
        %v493 = vpop.xlane.xlu0 %492
        %v494 = vsel %vm475, %v469, -inf
        %495 = vmax.xlane.f32.xlu0 %v494
        %v496 = vpop.xlane.xlu0 %495
        %v497 = vsel %vm475, %v472, -inf
        %498 = vmax.xlane.f32.xlu0 %v497
        %v499 = vpop.xlane.xlu0 %498
        %v500 = vsub.f32 %v445, %v478
        %v501 = vsub.f32 %v448, %v481
        %v502 = vsub.f32 %v453, %v484
        %v503 = vsub.f32 %v456, %v487
        %v504 = vsub.f32 %v461, %v490
        %v505 = vsub.f32 %v464, %v493
        %v506 = vsub.f32 %v469, %v496
        %v507 = vsub.f32 %v472, %v499
        %v508 = vmul.f32 %v500, 1.442695
        %v509 = vpow.pop %v508
        %v510 = vmul.f32 %v501, 1.442695
        %v511 = vpow.pop %v510
        %v512 = vmul.f32 %v502, 1.442695
        %v513 = vpow.pop %v512
        %v514 = vmul.f32 %v503, 1.442695
        %v515 = vpow.pop %v514
        %v516 = vmul.f32 %v504, 1.442695
        %v517 = vpow.pop %v516
        %v518 = vmul.f32 %v505, 1.442695
        %v519 = vpow.pop %v518
        %v520 = vmul.f32 %v506, 1.442695
        %v521 = vpow.pop %v520
        %v522 = vmul.f32 %v507, 1.442695
        %v523 = vpow.pop %v522
        %v524 = vpack.c.bf16 %v511, %v509
        %v525 = vpack.c.bf16 %v515, %v513
        %v526 = vpack.c.bf16 %v519, %v517
        %v527 = vpack.c.bf16 %v523, %v521
        %528 = vrot.lane.b32.xlu0 %v369, 64
        %v529 = vpop.permute.xlu0 %528
        %530 = vrot.lane.b32.xlu0 %v370, 64
        %v531 = vpop.permute.xlu0 %530
        %532 = vrot.lane.b32.xlu0 %v371, 64
        %v533 = vpop.permute.xlu0 %532
        %534 = vrot.lane.b32.xlu0 %v372, 64
        %v535 = vpop.permute.xlu0 %534
        %v541 = vsel %vm475, %v524, 0
        %v544 = vsel %vm475, %v525, 0
        %v547 = vsel %vm475, %v526, 0
        %v550 = vsel %vm475, %v527, 0
        %552 = vmatprep.subr.bf16.mxu0 0
        %553 = vmatpush1.bf16.msra.mxu0 %v529
        %554 = vmatprep.subr.bf16.mxu0 0
        %555 = vmatpush1.bf16.msra.mxu0 %v531
        %556 = vmatprep.subr.bf16.mxu0 0
        %557 = vmatpush1.bf16.msra.mxu0 %v533
        %558 = vmatprep.subr.bf16.mxu0 0
        %559 = vmatpush1.bf16.msra.mxu0 %v535
        %560 = vmatprep.subr.bf16.mxu0 0
        %561 = vmatpush1.bf16.msra.mxu0 0
        %562 = vmatprep.subr.bf16.mxu0 0
        %563 = vmatpush1.bf16.msra.mxu0 0
        %564 = vmatprep.subr.bf16.mxu0 0
        %565 = vmatpush1.bf16.msra.mxu0 0
        %566 = vmatprep.subr.bf16.mxu0 0
        %567 = vmatpush1.bf16.msra.mxu0 0
        %568 = vmatprep.subr.bf16.mxu0 0
        %569 = vmatpush1.bf16.msra.mxu0 0
        %570 = vmatprep.subr.bf16.mxu0 0
        %571 = vmatpush1.bf16.msra.mxu0 0
        %572 = vmatprep.subr.bf16.mxu0 0
        %573 = vmatpush1.bf16.msra.mxu0 0
        %574 = vmatprep.subr.bf16.mxu0 0
        %575 = vmatpush1.bf16.msra.mxu0 0
        %576 = vmatprep.subr.bf16.mxu0 0
        %577 = vmatpush1.bf16.msra.mxu0 0
        %578 = vmatprep.subr.bf16.mxu0 0
        %579 = vmatpush1.bf16.msra.mxu0 0
        %580 = vmatprep.subr.bf16.mxu0 0
        %581 = vmatpush1.bf16.msra.mxu0 0
        %582 = vmatprep.subr.bf16.mxu0 0
        %583 = vmatpush1.bf16.msra.mxu0 0
        %584 = vmatprep.mubr.bf16.mxu0 0
        %585 = vmatmul.mubr.bf16.gmra.mrb[0].mxu0 %v541
        %v586 = vpop.f32.mrb[0].mxu0
        %v587 = vadd.f32 0.0, %v586
        %v588 = vpop.f32.mrb[0].mxu0
        %v589 = vpop.f32.mrb[0].mxu0
        %v590 = vadd.f32 0.0, %v589
        %v591 = vpop.f32.mrb[0].mxu0
        %592 = vmatprep.mubr.bf16.mxu0 0
        %593 = vmatmul.mubr.bf16.gmra.mrb[0].mxu0 %v544
        %v594 = vpop.f32.mrb[0].mxu0
        %v595 = vadd.f32 0.0, %v594
        %v596 = vpop.f32.mrb[0].mxu0
        %v597 = vpop.f32.mrb[0].mxu0
        %v598 = vadd.f32 0.0, %v597
        %v599 = vpop.f32.mrb[0].mxu0
        %600 = vmatprep.mubr.bf16.mxu0 0
        %601 = vmatmul.mubr.bf16.gmra.mrb[0].mxu0 %v547
        %v602 = vpop.f32.mrb[0].mxu0
        %v603 = vadd.f32 0.0, %v602
        %v604 = vpop.f32.mrb[0].mxu0
        %v605 = vpop.f32.mrb[0].mxu0
        %v606 = vadd.f32 0.0, %v605
        %v607 = vpop.f32.mrb[0].mxu0
        %608 = vmatprep.mubr.bf16.mxu0 0
        %609 = vmatmul.mubr.bf16.gmra.mrb[0].mxu0 %v550
        %v610 = vpop.f32.mrb[0].mxu0
        %v611 = vadd.f32 0.0, %v610
        %v612 = vpop.f32.mrb[0].mxu0
        %v613 = vpop.f32.mrb[0].mxu0
        %v614 = vadd.f32 0.0, %v613
        %v615 = vpop.f32.mrb[0].mxu0
        %616 = vdwg.mxu0
        %v617 = vrcp.pop %v587
        %v618 = vrcp.pop %v590
        %v619 = vrcp.pop %v595
        %v620 = vrcp.pop %v598
        %v621 = vrcp.pop %v603
        %v622 = vrcp.pop %v606
        %v623 = vrcp.pop %v611
        %v624 = vrcp.pop %v614
        %626 = vset.pattern.permute.xlu0 8
        %627 = vperm.xlu0 %626, %v617
        %v628 = vpop.permute.xlu0 %627
        %631 = vset.pattern.permute.xlu0 8
        %632 = vperm.xlu0 %631, %v618
        %v633 = vpop.permute.xlu0 %632
        %636 = vset.pattern.permute.xlu0 8
        %637 = vperm.xlu0 %636, %v619
        %v638 = vpop.permute.xlu0 %637
        %641 = vset.pattern.permute.xlu0 8
        %642 = vperm.xlu0 %641, %v620
        %v643 = vpop.permute.xlu0 %642
        %646 = vset.pattern.permute.xlu0 8
        %647 = vperm.xlu0 %646, %v621
        %v648 = vpop.permute.xlu0 %647
        %651 = vset.pattern.permute.xlu0 8
        %652 = vperm.xlu0 %651, %v622
        %v653 = vpop.permute.xlu0 %652
        %656 = vset.pattern.permute.xlu0 8
        %657 = vperm.xlu0 %656, %v623
        %v658 = vpop.permute.xlu0 %657
        %661 = vset.pattern.permute.xlu0 8
        %662 = vperm.xlu0 %661, %v624
        %v663 = vpop.permute.xlu0 %662
        %v665 = vmul.f32 %v587, %v628
        %v666 = vmul.f32 %v590, %v633
        %v667 = vmul.f32 %v595, %v638
        %v668 = vmul.f32 %v598, %v643
        %v669 = vmul.f32 %v603, %v648
        %v670 = vmul.f32 %v606, %v653
        %v671 = vmul.f32 %v611, %v658
        %v672 = vmul.f32 %v614, %v663
        %v673 = vpack.c.bf16 %v666, %v665
        %v674 = vpack.c.bf16 %v668, %v667
        %v675 = vpack.c.bf16 %v670, %v669
        %v676 = vpack.c.bf16 %v672, %v671
        %677 = vrot.lane.b32.xlu0 %v369, 120
        %v678 = vpop.permute.xlu0 %677
        %679 = vrot.lane.b32.xlu0 %v370, 120
        %v680 = vpop.permute.xlu0 %679
        %681 = vrot.lane.b32.xlu0 %v371, 120
        %v682 = vpop.permute.xlu0 %681
        %683 = vrot.lane.b32.xlu0 %v372, 120
        %v684 = vpop.permute.xlu0 %683
        %685 = vrot.lane.b32.xlu0 %v369, 88
        %v686 = vpop.permute.xlu0 %685
        %687 = vrot.lane.b32.xlu0 %v370, 88
        %v688 = vpop.permute.xlu0 %687
        %689 = vrot.lane.b32.xlu0 %v371, 88
        %v690 = vpop.permute.xlu0 %689
        %691 = vrot.lane.b32.xlu0 %v372, 88
        %v692 = vpop.permute.xlu0 %691
        %v694 = vsel %vm385, %v678, 0
        %v697 = vsel %vm385, %v680, 0
        %v700 = vsel %vm385, %v682, 0
        %v703 = vsel %vm385, %v684, 0
        %v706 = vsel %vm385, %v686, 0
        %v709 = vsel %vm385, %v688, 0
        %v712 = vsel %vm385, %v690, 0
        %v715 = vsel %vm385, %v692, 0
        %717 = vmatprep.subr.bf16.mxu0 0
        %718 = vmatpush1.bf16.xpose.msra.mxu0 %v706
        %719 = vmatprep.subr.bf16.mxu0 0
        %720 = vmatpush1.bf16.xpose.msra.mxu0 %v709
        %721 = vmatprep.subr.bf16.mxu0 0
        %722 = vmatpush1.bf16.xpose.msra.mxu0 %v712
        %723 = vmatprep.subr.bf16.mxu0 0
        %724 = vmatpush1.bf16.xpose.msra.mxu0 %v715
        %725 = vmatprep.subr.bf16.mxu0 0
        %726 = vmatpush1.bf16.xpose.msra.mxu0 0
        %727 = vmatprep.subr.bf16.mxu0 0
        %728 = vmatpush1.bf16.xpose.msra.mxu0 0
        %729 = vmatprep.subr.bf16.mxu0 0
        %730 = vmatpush1.bf16.xpose.msra.mxu0 0
        %731 = vmatprep.subr.bf16.mxu0 0
        %732 = vmatpush1.bf16.xpose.msra.mxu0 0
        %733 = vmatprep.subr.bf16.mxu0 0
        %734 = vmatpush1.bf16.xpose.msra.mxu0 0
        %735 = vmatprep.subr.bf16.mxu0 0
        %736 = vmatpush1.bf16.xpose.msra.mxu0 0
        %737 = vmatprep.subr.bf16.mxu0 0
        %738 = vmatpush1.bf16.xpose.msra.mxu0 0
        %739 = vmatprep.subr.bf16.mxu0 0
        %740 = vmatpush1.bf16.xpose.msra.mxu0 0
        %741 = vmatprep.subr.bf16.mxu0 0
        %742 = vmatpush1.bf16.xpose.msra.mxu0 0
        %743 = vmatprep.subr.bf16.mxu0 0
        %744 = vmatpush1.bf16.xpose.msra.mxu0 0
        %745 = vmatprep.subr.bf16.mxu0 0
        %746 = vmatpush1.bf16.xpose.msra.mxu0 0
        %747 = vmatprep.subr.bf16.mxu0 0
        %748 = vmatpush1.bf16.xpose.msra.mxu0 0
        %749 = vmatprep.mubr.bf16.mxu0 0
        %750 = vmatmul.mubr.bf16.gmra.mrb[0].mxu0 %v694
        %v751 = vpop.f32.mrb[0].mxu0
        %v752 = vadd.f32 0.0, %v751
        %v753 = vpop.f32.mrb[0].mxu0
        %v754 = vpop.f32.mrb[0].mxu0
        %v755 = vadd.f32 0.0, %v754
        %v756 = vpop.f32.mrb[0].mxu0
        %757 = vmatprep.mubr.bf16.mxu0 0
        %758 = vmatmul.mubr.bf16.gmra.mrb[0].mxu0 %v697
        %v759 = vpop.f32.mrb[0].mxu0
        %v760 = vadd.f32 0.0, %v759
        %v761 = vpop.f32.mrb[0].mxu0
        %v762 = vpop.f32.mrb[0].mxu0
        %v763 = vadd.f32 0.0, %v762
        %v764 = vpop.f32.mrb[0].mxu0
        %765 = vmatprep.mubr.bf16.mxu0 0
        %766 = vmatmul.mubr.bf16.gmra.mrb[0].mxu0 %v700
        %v767 = vpop.f32.mrb[0].mxu0
        %v768 = vadd.f32 0.0, %v767
        %v769 = vpop.f32.mrb[0].mxu0
        %v770 = vpop.f32.mrb[0].mxu0
        %v771 = vadd.f32 0.0, %v770
        %v772 = vpop.f32.mrb[0].mxu0
        %773 = vmatprep.mubr.bf16.mxu0 0
        %774 = vmatmul.mubr.bf16.gmra.mrb[0].mxu0 %v703
        %v775 = vpop.f32.mrb[0].mxu0
        %v776 = vadd.f32 0.0, %v775
        %v777 = vpop.f32.mrb[0].mxu0
        %v778 = vpop.f32.mrb[0].mxu0
        %v779 = vadd.f32 0.0, %v778
        %v780 = vpop.f32.mrb[0].mxu0
        %781 = vdwg.mxu0
        %v782 = vsel %vm475, %v752, -inf
        %783 = vmax.xlane.f32.xlu0 %v782
        %v784 = vpop.xlane.xlu0 %783
        %v785 = vsel %vm475, %v755, -inf
        %786 = vmax.xlane.f32.xlu0 %v785
        %v787 = vpop.xlane.xlu0 %786
        %v788 = vsel %vm475, %v760, -inf
        %789 = vmax.xlane.f32.xlu0 %v788
        %v790 = vpop.xlane.xlu0 %789
        %v791 = vsel %vm475, %v763, -inf
        %792 = vmax.xlane.f32.xlu0 %v791
        %v793 = vpop.xlane.xlu0 %792
        %v794 = vsel %vm475, %v768, -inf
        %795 = vmax.xlane.f32.xlu0 %v794
        %v796 = vpop.xlane.xlu0 %795
        %v797 = vsel %vm475, %v771, -inf
        %798 = vmax.xlane.f32.xlu0 %v797
        %v799 = vpop.xlane.xlu0 %798
        %v800 = vsel %vm475, %v776, -inf
        %801 = vmax.xlane.f32.xlu0 %v800
        %v802 = vpop.xlane.xlu0 %801
        %v803 = vsel %vm475, %v779, -inf
        %804 = vmax.xlane.f32.xlu0 %v803
        %v805 = vpop.xlane.xlu0 %804
        %v806 = vsub.f32 %v752, %v784
        %v807 = vsub.f32 %v755, %v787
        %v808 = vsub.f32 %v760, %v790
        %v809 = vsub.f32 %v763, %v793
        %v810 = vsub.f32 %v768, %v796
        %v811 = vsub.f32 %v771, %v799
        %v812 = vsub.f32 %v776, %v802
        %v813 = vsub.f32 %v779, %v805
        %v814 = vmul.f32 %v806, 1.442695
        %v815 = vpow.pop %v814
        %v816 = vmul.f32 %v807, 1.442695
        %v817 = vpow.pop %v816
        %v818 = vmul.f32 %v808, 1.442695
        %v819 = vpow.pop %v818
        %v820 = vmul.f32 %v809, 1.442695
        %v821 = vpow.pop %v820
        %v822 = vmul.f32 %v810, 1.442695
        %v823 = vpow.pop %v822
        %v824 = vmul.f32 %v811, 1.442695
        %v825 = vpow.pop %v824
        %v826 = vmul.f32 %v812, 1.442695
        %v827 = vpow.pop %v826
        %v828 = vmul.f32 %v813, 1.442695
        %v829 = vpow.pop %v828
        %v830 = vpack.c.bf16 %v817, %v815
        %v831 = vpack.c.bf16 %v821, %v819
        %v832 = vpack.c.bf16 %v825, %v823
        %v833 = vpack.c.bf16 %v829, %v827
        %834 = vrot.lane.b32.xlu0 %v369, 55
        %v835 = vpop.permute.xlu0 %834
        %836 = vrot.lane.b32.xlu0 %v370, 55
        %v837 = vpop.permute.xlu0 %836
        %838 = vrot.lane.b32.xlu0 %v371, 55
        %v839 = vpop.permute.xlu0 %838
        %840 = vrot.lane.b32.xlu0 %v372, 55
        %v841 = vpop.permute.xlu0 %840
        %v847 = vsel %vm475, %v830, 0
        %v850 = vsel %vm475, %v831, 0
        %v853 = vsel %vm475, %v832, 0
        %v856 = vsel %vm475, %v833, 0
        %858 = vmatprep.subr.bf16.mxu0 0
        %859 = vmatpush1.bf16.msra.mxu0 %v835
        %860 = vmatprep.subr.bf16.mxu0 0
        %861 = vmatpush1.bf16.msra.mxu0 %v837
        %862 = vmatprep.subr.bf16.mxu0 0
        %863 = vmatpush1.bf16.msra.mxu0 %v839
        %864 = vmatprep.subr.bf16.mxu0 0
        %865 = vmatpush1.bf16.msra.mxu0 %v841
        %866 = vmatprep.subr.bf16.mxu0 0
        %867 = vmatpush1.bf16.msra.mxu0 0
        %868 = vmatprep.subr.bf16.mxu0 0
        %869 = vmatpush1.bf16.msra.mxu0 0
        %870 = vmatprep.subr.bf16.mxu0 0
        %871 = vmatpush1.bf16.msra.mxu0 0
        %872 = vmatprep.subr.bf16.mxu0 0
        %873 = vmatpush1.bf16.msra.mxu0 0
        %874 = vmatprep.subr.bf16.mxu0 0
        %875 = vmatpush1.bf16.msra.mxu0 0
        %876 = vmatprep.subr.bf16.mxu0 0
        %877 = vmatpush1.bf16.msra.mxu0 0
        %878 = vmatprep.subr.bf16.mxu0 0
        %879 = vmatpush1.bf16.msra.mxu0 0
        %880 = vmatprep.subr.bf16.mxu0 0
        %881 = vmatpush1.bf16.msra.mxu0 0
        %882 = vmatprep.subr.bf16.mxu0 0
        %883 = vmatpush1.bf16.msra.mxu0 0
        %884 = vmatprep.subr.bf16.mxu0 0
        %885 = vmatpush1.bf16.msra.mxu0 0
        %886 = vmatprep.subr.bf16.mxu0 0
        %887 = vmatpush1.bf16.msra.mxu0 0
        %888 = vmatprep.subr.bf16.mxu0 0
        %889 = vmatpush1.bf16.msra.mxu0 0
        %890 = vmatprep.mubr.bf16.mxu0 0
        %891 = vmatmul.mubr.bf16.gmra.mrb[0].mxu0 %v847
        %v892 = vpop.f32.mrb[0].mxu0
        %v893 = vadd.f32 0.0, %v892
        %v894 = vpop.f32.mrb[0].mxu0
        %v895 = vpop.f32.mrb[0].mxu0
        %v896 = vadd.f32 0.0, %v895
        %v897 = vpop.f32.mrb[0].mxu0
        %898 = vmatprep.mubr.bf16.mxu0 0
        %899 = vmatmul.mubr.bf16.gmra.mrb[0].mxu0 %v850
        %v900 = vpop.f32.mrb[0].mxu0
        %v901 = vadd.f32 0.0, %v900
        %v902 = vpop.f32.mrb[0].mxu0
        %v903 = vpop.f32.mrb[0].mxu0
        %v904 = vadd.f32 0.0, %v903
        %v905 = vpop.f32.mrb[0].mxu0
        %906 = vmatprep.mubr.bf16.mxu0 0
        %907 = vmatmul.mubr.bf16.gmra.mrb[0].mxu0 %v853
        %v908 = vpop.f32.mrb[0].mxu0
        %v909 = vadd.f32 0.0, %v908
        %v910 = vpop.f32.mrb[0].mxu0
        %v911 = vpop.f32.mrb[0].mxu0
        %v912 = vadd.f32 0.0, %v911
        %v913 = vpop.f32.mrb[0].mxu0
        %914 = vmatprep.mubr.bf16.mxu0 0
        %915 = vmatmul.mubr.bf16.gmra.mrb[0].mxu0 %v856
        %v916 = vpop.f32.mrb[0].mxu0
        %v917 = vadd.f32 0.0, %v916
        %v918 = vpop.f32.mrb[0].mxu0
        %v919 = vpop.f32.mrb[0].mxu0
        %v920 = vadd.f32 0.0, %v919
        %v921 = vpop.f32.mrb[0].mxu0
        %922 = vdwg.mxu0
        %v923 = vrcp.pop %v893
        %v924 = vrcp.pop %v896
        %v925 = vrcp.pop %v901
        %v926 = vrcp.pop %v904
        %v927 = vrcp.pop %v909
        %v928 = vrcp.pop %v912
        %v929 = vrcp.pop %v917
        %v930 = vrcp.pop %v920
        %932 = vset.pattern.permute.xlu0 8
        %933 = vperm.xlu0 %932, %v923
        %v934 = vpop.permute.xlu0 %933
        %937 = vset.pattern.permute.xlu0 8
        %938 = vperm.xlu0 %937, %v924
        %v939 = vpop.permute.xlu0 %938
        %942 = vset.pattern.permute.xlu0 8
        %943 = vperm.xlu0 %942, %v925
        %v944 = vpop.permute.xlu0 %943
        %947 = vset.pattern.permute.xlu0 8
        %948 = vperm.xlu0 %947, %v926
        %v949 = vpop.permute.xlu0 %948
        %952 = vset.pattern.permute.xlu0 8
        %953 = vperm.xlu0 %952, %v927
        %v954 = vpop.permute.xlu0 %953
        %957 = vset.pattern.permute.xlu0 8
        %958 = vperm.xlu0 %957, %v928
        %v959 = vpop.permute.xlu0 %958
        %962 = vset.pattern.permute.xlu0 8
        %963 = vperm.xlu0 %962, %v929
        %v964 = vpop.permute.xlu0 %963
        %967 = vset.pattern.permute.xlu0 8
        %968 = vperm.xlu0 %967, %v930
        %v969 = vpop.permute.xlu0 %968
        %v971 = vmul.f32 %v893, %v934
        %v972 = vmul.f32 %v896, %v939
        %v973 = vmul.f32 %v901, %v944
        %v974 = vmul.f32 %v904, %v949
        %v975 = vmul.f32 %v909, %v954
        %v976 = vmul.f32 %v912, %v959
        %v977 = vmul.f32 %v917, %v964
        %v978 = vmul.f32 %v920, %v969
        %v979 = vpack.c.bf16 %v972, %v971
        %v980 = vpack.c.bf16 %v974, %v973
        %v981 = vpack.c.bf16 %v976, %v975
        %v982 = vpack.c.bf16 %v978, %v977
        %983 = vrot.lane.b32.xlu0 %v369, 112
        %v984 = vpop.permute.xlu0 %983
        %985 = vrot.lane.b32.xlu0 %v370, 112
        %v986 = vpop.permute.xlu0 %985
        %987 = vrot.lane.b32.xlu0 %v371, 112
        %v988 = vpop.permute.xlu0 %987
        %989 = vrot.lane.b32.xlu0 %v372, 112
        %v990 = vpop.permute.xlu0 %989
        %991 = vrot.lane.b32.xlu0 %v369, 80
        %v992 = vpop.permute.xlu0 %991
        %993 = vrot.lane.b32.xlu0 %v370, 80
        %v994 = vpop.permute.xlu0 %993
        %995 = vrot.lane.b32.xlu0 %v371, 80
        %v996 = vpop.permute.xlu0 %995
        %997 = vrot.lane.b32.xlu0 %v372, 80
        %v998 = vpop.permute.xlu0 %997
        %v1000 = vsel %vm385, %v984, 0
        %v1003 = vsel %vm385, %v986, 0
        %v1006 = vsel %vm385, %v988, 0
        %v1009 = vsel %vm385, %v990, 0
        %v1012 = vsel %vm385, %v992, 0
        %v1015 = vsel %vm385, %v994, 0
        %v1018 = vsel %vm385, %v996, 0
        %v1021 = vsel %vm385, %v998, 0
        %1023 = vmatprep.subr.bf16.mxu0 0
        %1024 = vmatpush1.bf16.xpose.msra.mxu0 %v1012
        %1025 = vmatprep.subr.bf16.mxu0 0
        %1026 = vmatpush1.bf16.xpose.msra.mxu0 %v1015
        %1027 = vmatprep.subr.bf16.mxu0 0
        %1028 = vmatpush1.bf16.xpose.msra.mxu0 %v1018
        %1029 = vmatprep.subr.bf16.mxu0 0
        %1030 = vmatpush1.bf16.xpose.msra.mxu0 %v1021
        %1031 = vmatprep.subr.bf16.mxu0 0
        %1032 = vmatpush1.bf16.xpose.msra.mxu0 0
        %1033 = vmatprep.subr.bf16.mxu0 0
        %1034 = vmatpush1.bf16.xpose.msra.mxu0 0
        %1035 = vmatprep.subr.bf16.mxu0 0
        %1036 = vmatpush1.bf16.xpose.msra.mxu0 0
        %1037 = vmatprep.subr.bf16.mxu0 0
        %1038 = vmatpush1.bf16.xpose.msra.mxu0 0
        %1039 = vmatprep.subr.bf16.mxu0 0
        %1040 = vmatpush1.bf16.xpose.msra.mxu0 0
        %1041 = vmatprep.subr.bf16.mxu0 0
        %1042 = vmatpush1.bf16.xpose.msra.mxu0 0
        %1043 = vmatprep.subr.bf16.mxu0 0
        %1044 = vmatpush1.bf16.xpose.msra.mxu0 0
        %1045 = vmatprep.subr.bf16.mxu0 0
        %1046 = vmatpush1.bf16.xpose.msra.mxu0 0
        %1047 = vmatprep.subr.bf16.mxu0 0
        %1048 = vmatpush1.bf16.xpose.msra.mxu0 0
        %1049 = vmatprep.subr.bf16.mxu0 0
        %1050 = vmatpush1.bf16.xpose.msra.mxu0 0
        %1051 = vmatprep.subr.bf16.mxu0 0
        %1052 = vmatpush1.bf16.xpose.msra.mxu0 0
        %1053 = vmatprep.subr.bf16.mxu0 0
        %1054 = vmatpush1.bf16.xpose.msra.mxu0 0
        %1055 = vmatprep.mubr.bf16.mxu0 0
        %1056 = vmatmul.mubr.bf16.gmra.mrb[0].mxu0 %v1000
        %v1057 = vpop.f32.mrb[0].mxu0
        %v1058 = vadd.f32 0.0, %v1057
        %v1059 = vpop.f32.mrb[0].mxu0
        %v1060 = vpop.f32.mrb[0].mxu0
        %v1061 = vadd.f32 0.0, %v1060
        %v1062 = vpop.f32.mrb[0].mxu0
        %1063 = vmatprep.mubr.bf16.mxu0 0
        %1064 = vmatmul.mubr.bf16.gmra.mrb[0].mxu0 %v1003
        %v1065 = vpop.f32.mrb[0].mxu0
        %v1066 = vadd.f32 0.0, %v1065
        %v1067 = vpop.f32.mrb[0].mxu0
        %v1068 = vpop.f32.mrb[0].mxu0
        %v1069 = vadd.f32 0.0, %v1068
        %v1070 = vpop.f32.mrb[0].mxu0
        %1071 = vmatprep.mubr.bf16.mxu0 0
        %1072 = vmatmul.mubr.bf16.gmra.mrb[0].mxu0 %v1006
        %v1073 = vpop.f32.mrb[0].mxu0
        %v1074 = vadd.f32 0.0, %v1073
        %v1075 = vpop.f32.mrb[0].mxu0
        %v1076 = vpop.f32.mrb[0].mxu0
        %v1077 = vadd.f32 0.0, %v1076
        %v1078 = vpop.f32.mrb[0].mxu0
        %1079 = vmatprep.mubr.bf16.mxu0 0
        %1080 = vmatmul.mubr.bf16.gmra.mrb[0].mxu0 %v1009
        %v1081 = vpop.f32.mrb[0].mxu0
        %v1082 = vadd.f32 0.0, %v1081
        %v1083 = vpop.f32.mrb[0].mxu0
        %v1084 = vpop.f32.mrb[0].mxu0
        %v1085 = vadd.f32 0.0, %v1084
        %v1086 = vpop.f32.mrb[0].mxu0
        %1087 = vdwg.mxu0
        %v1088 = vsel %vm475, %v1058, -inf
        %1089 = vmax.xlane.f32.xlu0 %v1088
        %v1090 = vpop.xlane.xlu0 %1089
        %v1091 = vsel %vm475, %v1061, -inf
        %1092 = vmax.xlane.f32.xlu0 %v1091
        %v1093 = vpop.xlane.xlu0 %1092
        %v1094 = vsel %vm475, %v1066, -inf
        %1095 = vmax.xlane.f32.xlu0 %v1094
        %v1096 = vpop.xlane.xlu0 %1095
        %v1097 = vsel %vm475, %v1069, -inf
        %1098 = vmax.xlane.f32.xlu0 %v1097
        %v1099 = vpop.xlane.xlu0 %1098
        %v1100 = vsel %vm475, %v1074, -inf
        %1101 = vmax.xlane.f32.xlu0 %v1100
        %v1102 = vpop.xlane.xlu0 %1101
        %v1103 = vsel %vm475, %v1077, -inf
        %1104 = vmax.xlane.f32.xlu0 %v1103
        %v1105 = vpop.xlane.xlu0 %1104
        %v1106 = vsel %vm475, %v1082, -inf
        %1107 = vmax.xlane.f32.xlu0 %v1106
        %v1108 = vpop.xlane.xlu0 %1107
        %v1109 = vsel %vm475, %v1085, -inf
        %1110 = vmax.xlane.f32.xlu0 %v1109
        %v1111 = vpop.xlane.xlu0 %1110
        %v1112 = vsub.f32 %v1058, %v1090
        %v1113 = vsub.f32 %v1061, %v1093
        %v1114 = vsub.f32 %v1066, %v1096
        %v1115 = vsub.f32 %v1069, %v1099
        %v1116 = vsub.f32 %v1074, %v1102
        %v1117 = vsub.f32 %v1077, %v1105
        %v1118 = vsub.f32 %v1082, %v1108
        %v1119 = vsub.f32 %v1085, %v1111
        %v1120 = vmul.f32 %v1112, 1.442695
        %v1121 = vpow.pop %v1120
        %v1122 = vmul.f32 %v1113, 1.442695
        %v1123 = vpow.pop %v1122
        %v1124 = vmul.f32 %v1114, 1.442695
        %v1125 = vpow.pop %v1124
        %v1126 = vmul.f32 %v1115, 1.442695
        %v1127 = vpow.pop %v1126
        %v1128 = vmul.f32 %v1116, 1.442695
        %v1129 = vpow.pop %v1128
        %v1130 = vmul.f32 %v1117, 1.442695
        %v1131 = vpow.pop %v1130
        %v1132 = vmul.f32 %v1118, 1.442695
        %v1133 = vpow.pop %v1132
        %v1134 = vmul.f32 %v1119, 1.442695
        %v1135 = vpow.pop %v1134
        %v1136 = vpack.c.bf16 %v1123, %v1121
        %v1137 = vpack.c.bf16 %v1127, %v1125
        %v1138 = vpack.c.bf16 %v1131, %v1129
        %v1139 = vpack.c.bf16 %v1135, %v1133
        %1140 = vrot.lane.b32.xlu0 %v369, 46
        %v1141 = vpop.permute.xlu0 %1140
        %1142 = vrot.lane.b32.xlu0 %v370, 46
        %v1143 = vpop.permute.xlu0 %1142
        %1144 = vrot.lane.b32.xlu0 %v371, 46
        %v1145 = vpop.permute.xlu0 %1144
        %1146 = vrot.lane.b32.xlu0 %v372, 46
        %v1147 = vpop.permute.xlu0 %1146
        %v1153 = vsel %vm475, %v1136, 0
        %v1156 = vsel %vm475, %v1137, 0
        %v1159 = vsel %vm475, %v1138, 0
        %v1162 = vsel %vm475, %v1139, 0
        %1164 = vmatprep.subr.bf16.mxu0 0
        %1165 = vmatpush1.bf16.msra.mxu0 %v1141
        %1166 = vmatprep.subr.bf16.mxu0 0
        %1167 = vmatpush1.bf16.msra.mxu0 %v1143
        %1168 = vmatprep.subr.bf16.mxu0 0
        %1169 = vmatpush1.bf16.msra.mxu0 %v1145
        %1170 = vmatprep.subr.bf16.mxu0 0
        %1171 = vmatpush1.bf16.msra.mxu0 %v1147
        %1172 = vmatprep.subr.bf16.mxu0 0
        %1173 = vmatpush1.bf16.msra.mxu0 0
        %1174 = vmatprep.subr.bf16.mxu0 0
        %1175 = vmatpush1.bf16.msra.mxu0 0
        %1176 = vmatprep.subr.bf16.mxu0 0
        %1177 = vmatpush1.bf16.msra.mxu0 0
        %1178 = vmatprep.subr.bf16.mxu0 0
        %1179 = vmatpush1.bf16.msra.mxu0 0
        %1180 = vmatprep.subr.bf16.mxu0 0
        %1181 = vmatpush1.bf16.msra.mxu0 0
        %1182 = vmatprep.subr.bf16.mxu0 0
        %1183 = vmatpush1.bf16.msra.mxu0 0
        %1184 = vmatprep.subr.bf16.mxu0 0
        %1185 = vmatpush1.bf16.msra.mxu0 0
        %1186 = vmatprep.subr.bf16.mxu0 0
        %1187 = vmatpush1.bf16.msra.mxu0 0
        %1188 = vmatprep.subr.bf16.mxu0 0
        %1189 = vmatpush1.bf16.msra.mxu0 0
        %1190 = vmatprep.subr.bf16.mxu0 0
        %1191 = vmatpush1.bf16.msra.mxu0 0
        %1192 = vmatprep.subr.bf16.mxu0 0
        %1193 = vmatpush1.bf16.msra.mxu0 0
        %1194 = vmatprep.subr.bf16.mxu0 0
        %1195 = vmatpush1.bf16.msra.mxu0 0
        %1196 = vmatprep.mubr.bf16.mxu0 0
        %1197 = vmatmul.mubr.bf16.gmra.mrb[0].mxu0 %v1153
        %v1198 = vpop.f32.mrb[0].mxu0
        %v1199 = vadd.f32 0.0, %v1198
        %v1200 = vpop.f32.mrb[0].mxu0
        %v1201 = vpop.f32.mrb[0].mxu0
        %v1202 = vadd.f32 0.0, %v1201
        %v1203 = vpop.f32.mrb[0].mxu0
        %1204 = vmatprep.mubr.bf16.mxu0 0
        %1205 = vmatmul.mubr.bf16.gmra.mrb[0].mxu0 %v1156
        %v1206 = vpop.f32.mrb[0].mxu0
        %v1207 = vadd.f32 0.0, %v1206
        %v1208 = vpop.f32.mrb[0].mxu0
        %v1209 = vpop.f32.mrb[0].mxu0
        %v1210 = vadd.f32 0.0, %v1209
        %v1211 = vpop.f32.mrb[0].mxu0
        %1212 = vmatprep.mubr.bf16.mxu0 0
        %1213 = vmatmul.mubr.bf16.gmra.mrb[0].mxu0 %v1159
        %v1214 = vpop.f32.mrb[0].mxu0
        %v1215 = vadd.f32 0.0, %v1214
        %v1216 = vpop.f32.mrb[0].mxu0
        %v1217 = vpop.f32.mrb[0].mxu0
        %v1218 = vadd.f32 0.0, %v1217
        %v1219 = vpop.f32.mrb[0].mxu0
        %1220 = vmatprep.mubr.bf16.mxu0 0
        %1221 = vmatmul.mubr.bf16.gmra.mrb[0].mxu0 %v1162
        %v1222 = vpop.f32.mrb[0].mxu0
        %v1223 = vadd.f32 0.0, %v1222
        %v1224 = vpop.f32.mrb[0].mxu0
        %v1225 = vpop.f32.mrb[0].mxu0
        %v1226 = vadd.f32 0.0, %v1225
        %v1227 = vpop.f32.mrb[0].mxu0
        %1228 = vdwg.mxu0
        %v1229 = vrcp.pop %v1199
        %v1230 = vrcp.pop %v1202
        %v1231 = vrcp.pop %v1207
        %v1232 = vrcp.pop %v1210
        %v1233 = vrcp.pop %v1215
        %v1234 = vrcp.pop %v1218
        %v1235 = vrcp.pop %v1223
        %v1236 = vrcp.pop %v1226
        %1238 = vset.pattern.permute.xlu0 8
        %1239 = vperm.xlu0 %1238, %v1229
        %v1240 = vpop.permute.xlu0 %1239
        %1243 = vset.pattern.permute.xlu0 8
        %1244 = vperm.xlu0 %1243, %v1230
        %v1245 = vpop.permute.xlu0 %1244
        %1248 = vset.pattern.permute.xlu0 8
        %1249 = vperm.xlu0 %1248, %v1231
        %v1250 = vpop.permute.xlu0 %1249
        %1253 = vset.pattern.permute.xlu0 8
        %1254 = vperm.xlu0 %1253, %v1232
        %v1255 = vpop.permute.xlu0 %1254
        %1258 = vset.pattern.permute.xlu0 8
        %1259 = vperm.xlu0 %1258, %v1233
        %v1260 = vpop.permute.xlu0 %1259
        %1263 = vset.pattern.permute.xlu0 8
        %1264 = vperm.xlu0 %1263, %v1234
        %v1265 = vpop.permute.xlu0 %1264
        %1268 = vset.pattern.permute.xlu0 8
        %1269 = vperm.xlu0 %1268, %v1235
        %v1270 = vpop.permute.xlu0 %1269
        %1273 = vset.pattern.permute.xlu0 8
        %1274 = vperm.xlu0 %1273, %v1236
        %v1275 = vpop.permute.xlu0 %1274
        %v1277 = vmul.f32 %v1199, %v1240
        %v1278 = vmul.f32 %v1202, %v1245
        %v1279 = vmul.f32 %v1207, %v1250
        %v1280 = vmul.f32 %v1210, %v1255
        %v1281 = vmul.f32 %v1215, %v1260
        %v1282 = vmul.f32 %v1218, %v1265
        %v1283 = vmul.f32 %v1223, %v1270
        %v1284 = vmul.f32 %v1226, %v1275
        %v1285 = vpack.c.bf16 %v1278, %v1277
        %v1286 = vpack.c.bf16 %v1280, %v1279
        %v1287 = vpack.c.bf16 %v1282, %v1281
        %v1288 = vpack.c.bf16 %v1284, %v1283
        %1289 = vrot.lane.b32.xlu0 %v369, 104
        %v1290 = vpop.permute.xlu0 %1289
        %1291 = vrot.lane.b32.xlu0 %v370, 104
        %v1292 = vpop.permute.xlu0 %1291
        %1293 = vrot.lane.b32.xlu0 %v371, 104
        %v1294 = vpop.permute.xlu0 %1293
        %1295 = vrot.lane.b32.xlu0 %v372, 104
        %v1296 = vpop.permute.xlu0 %1295
        %1297 = vrot.lane.b32.xlu0 %v369, 72
        %v1298 = vpop.permute.xlu0 %1297
        %1299 = vrot.lane.b32.xlu0 %v370, 72
        %v1300 = vpop.permute.xlu0 %1299
        %1301 = vrot.lane.b32.xlu0 %v371, 72
        %v1302 = vpop.permute.xlu0 %1301
        %1303 = vrot.lane.b32.xlu0 %v372, 72
        %v1304 = vpop.permute.xlu0 %1303
        %v1306 = vsel %vm385, %v1290, 0
        %v1309 = vsel %vm385, %v1292, 0
        %v1312 = vsel %vm385, %v1294, 0
        %v1315 = vsel %vm385, %v1296, 0
        %v1318 = vsel %vm385, %v1298, 0
        %v1321 = vsel %vm385, %v1300, 0
        %v1324 = vsel %vm385, %v1302, 0
        %v1327 = vsel %vm385, %v1304, 0
        %1329 = vmatprep.subr.bf16.mxu0 0
        %1330 = vmatpush1.bf16.xpose.msra.mxu0 %v1318
        %1331 = vmatprep.subr.bf16.mxu0 0
        %1332 = vmatpush1.bf16.xpose.msra.mxu0 %v1321
        %1333 = vmatprep.subr.bf16.mxu0 0
        %1334 = vmatpush1.bf16.xpose.msra.mxu0 %v1324
        %1335 = vmatprep.subr.bf16.mxu0 0
        %1336 = vmatpush1.bf16.xpose.msra.mxu0 %v1327
        %1337 = vmatprep.subr.bf16.mxu0 0
        %1338 = vmatpush1.bf16.xpose.msra.mxu0 0
        %1339 = vmatprep.subr.bf16.mxu0 0
        %1340 = vmatpush1.bf16.xpose.msra.mxu0 0
        %1341 = vmatprep.subr.bf16.mxu0 0
        %1342 = vmatpush1.bf16.xpose.msra.mxu0 0
        %1343 = vmatprep.subr.bf16.mxu0 0
        %1344 = vmatpush1.bf16.xpose.msra.mxu0 0
        %1345 = vmatprep.subr.bf16.mxu0 0
        %1346 = vmatpush1.bf16.xpose.msra.mxu0 0
        %1347 = vmatprep.subr.bf16.mxu0 0
        %1348 = vmatpush1.bf16.xpose.msra.mxu0 0
        %1349 = vmatprep.subr.bf16.mxu0 0
        %1350 = vmatpush1.bf16.xpose.msra.mxu0 0
        %1351 = vmatprep.subr.bf16.mxu0 0
        %1352 = vmatpush1.bf16.xpose.msra.mxu0 0
        %1353 = vmatprep.subr.bf16.mxu0 0
        %1354 = vmatpush1.bf16.xpose.msra.mxu0 0
        %1355 = vmatprep.subr.bf16.mxu0 0
        %1356 = vmatpush1.bf16.xpose.msra.mxu0 0
        %1357 = vmatprep.subr.bf16.mxu0 0
        %1358 = vmatpush1.bf16.xpose.msra.mxu0 0
        %1359 = vmatprep.subr.bf16.mxu0 0
        %1360 = vmatpush1.bf16.xpose.msra.mxu0 0
        %1361 = vmatprep.mubr.bf16.mxu0 0
        %1362 = vmatmul.mubr.bf16.gmra.mrb[0].mxu0 %v1306
        %v1363 = vpop.f32.mrb[0].mxu0
        %v1364 = vadd.f32 0.0, %v1363
        %v1365 = vpop.f32.mrb[0].mxu0
        %v1366 = vpop.f32.mrb[0].mxu0
        %v1367 = vadd.f32 0.0, %v1366
        %v1368 = vpop.f32.mrb[0].mxu0
        %1369 = vmatprep.mubr.bf16.mxu0 0
        %1370 = vmatmul.mubr.bf16.gmra.mrb[0].mxu0 %v1309
        %v1371 = vpop.f32.mrb[0].mxu0
        %v1372 = vadd.f32 0.0, %v1371
        %v1373 = vpop.f32.mrb[0].mxu0
        %v1374 = vpop.f32.mrb[0].mxu0
        %v1375 = vadd.f32 0.0, %v1374
        %v1376 = vpop.f32.mrb[0].mxu0
        %1377 = vmatprep.mubr.bf16.mxu0 0
        %1378 = vmatmul.mubr.bf16.gmra.mrb[0].mxu0 %v1312
        %v1379 = vpop.f32.mrb[0].mxu0
        %v1380 = vadd.f32 0.0, %v1379
        %v1381 = vpop.f32.mrb[0].mxu0
        %v1382 = vpop.f32.mrb[0].mxu0
        %v1383 = vadd.f32 0.0, %v1382
        %v1384 = vpop.f32.mrb[0].mxu0
        %1385 = vmatprep.mubr.bf16.mxu0 0
        %1386 = vmatmul.mubr.bf16.gmra.mrb[0].mxu0 %v1315
        %v1387 = vpop.f32.mrb[0].mxu0
        %v1388 = vadd.f32 0.0, %v1387
        %v1389 = vpop.f32.mrb[0].mxu0
        %v1390 = vpop.f32.mrb[0].mxu0
        %v1391 = vadd.f32 0.0, %v1390
        %v1392 = vpop.f32.mrb[0].mxu0
        %1393 = vdwg.mxu0
        %v1394 = vsel %vm475, %v1364, -inf
        %1395 = vmax.xlane.f32.xlu0 %v1394
        %v1396 = vpop.xlane.xlu0 %1395
        %v1397 = vsel %vm475, %v1367, -inf
        %1398 = vmax.xlane.f32.xlu0 %v1397
        %v1399 = vpop.xlane.xlu0 %1398
        %v1400 = vsel %vm475, %v1372, -inf
        %1401 = vmax.xlane.f32.xlu0 %v1400
        %v1402 = vpop.xlane.xlu0 %1401
        %v1403 = vsel %vm475, %v1375, -inf
        %1404 = vmax.xlane.f32.xlu0 %v1403
        %v1405 = vpop.xlane.xlu0 %1404
        %v1406 = vsel %vm475, %v1380, -inf
        %1407 = vmax.xlane.f32.xlu0 %v1406
        %v1408 = vpop.xlane.xlu0 %1407
        %v1409 = vsel %vm475, %v1383, -inf
        %1410 = vmax.xlane.f32.xlu0 %v1409
        %v1411 = vpop.xlane.xlu0 %1410
        %v1412 = vsel %vm475, %v1388, -inf
        %1413 = vmax.xlane.f32.xlu0 %v1412
        %v1414 = vpop.xlane.xlu0 %1413
        %v1415 = vsel %vm475, %v1391, -inf
        %1416 = vmax.xlane.f32.xlu0 %v1415
        %v1417 = vpop.xlane.xlu0 %1416
        %v1418 = vsub.f32 %v1364, %v1396
        %v1419 = vsub.f32 %v1367, %v1399
        %v1420 = vsub.f32 %v1372, %v1402
        %v1421 = vsub.f32 %v1375, %v1405
        %v1422 = vsub.f32 %v1380, %v1408
        %v1423 = vsub.f32 %v1383, %v1411
        %v1424 = vsub.f32 %v1388, %v1414
        %v1425 = vsub.f32 %v1391, %v1417
        %v1426 = vmul.f32 %v1418, 1.442695
        %v1427 = vpow.pop %v1426
        %v1428 = vmul.f32 %v1419, 1.442695
        %v1429 = vpow.pop %v1428
        %v1430 = vmul.f32 %v1420, 1.442695
        %v1431 = vpow.pop %v1430
        %v1432 = vmul.f32 %v1421, 1.442695
        %v1433 = vpow.pop %v1432
        %v1434 = vmul.f32 %v1422, 1.442695
        %v1435 = vpow.pop %v1434
        %v1436 = vmul.f32 %v1423, 1.442695
        %v1437 = vpow.pop %v1436
        %v1438 = vmul.f32 %v1424, 1.442695
        %v1439 = vpow.pop %v1438
        %v1440 = vmul.f32 %v1425, 1.442695
        %v1441 = vpow.pop %v1440
        %v1442 = vpack.c.bf16 %v1429, %v1427
        %v1443 = vpack.c.bf16 %v1433, %v1431
        %v1444 = vpack.c.bf16 %v1437, %v1435
        %v1445 = vpack.c.bf16 %v1441, %v1439
        %1446 = vrot.lane.b32.xlu0 %v369, 37
        %v1447 = vpop.permute.xlu0 %1446
        %1448 = vrot.lane.b32.xlu0 %v370, 37
        %v1449 = vpop.permute.xlu0 %1448
        %1450 = vrot.lane.b32.xlu0 %v371, 37
        %v1451 = vpop.permute.xlu0 %1450
        %1452 = vrot.lane.b32.xlu0 %v372, 37
        %v1453 = vpop.permute.xlu0 %1452
        %v1459 = vsel %vm475, %v1442, 0
        %v1462 = vsel %vm475, %v1443, 0
        %v1465 = vsel %vm475, %v1444, 0
        %v1468 = vsel %vm475, %v1445, 0
        %1470 = vmatprep.subr.bf16.mxu0 0
        %1471 = vmatpush1.bf16.msra.mxu0 %v1447
        %1472 = vmatprep.subr.bf16.mxu0 0
        %1473 = vmatpush1.bf16.msra.mxu0 %v1449
        %1474 = vmatprep.subr.bf16.mxu0 0
        %1475 = vmatpush1.bf16.msra.mxu0 %v1451
        %1476 = vmatprep.subr.bf16.mxu0 0
        %1477 = vmatpush1.bf16.msra.mxu0 %v1453
        %1478 = vmatprep.subr.bf16.mxu0 0
        %1479 = vmatpush1.bf16.msra.mxu0 0
        %1480 = vmatprep.subr.bf16.mxu0 0
        %1481 = vmatpush1.bf16.msra.mxu0 0
        %1482 = vmatprep.subr.bf16.mxu0 0
        %1483 = vmatpush1.bf16.msra.mxu0 0
        %1484 = vmatprep.subr.bf16.mxu0 0
        %1485 = vmatpush1.bf16.msra.mxu0 0
        %1486 = vmatprep.subr.bf16.mxu0 0
        %1487 = vmatpush1.bf16.msra.mxu0 0
        %1488 = vmatprep.subr.bf16.mxu0 0
        %1489 = vmatpush1.bf16.msra.mxu0 0
        %1490 = vmatprep.subr.bf16.mxu0 0
        %1491 = vmatpush1.bf16.msra.mxu0 0
        %1492 = vmatprep.subr.bf16.mxu0 0
        %1493 = vmatpush1.bf16.msra.mxu0 0
        %1494 = vmatprep.subr.bf16.mxu0 0
        %1495 = vmatpush1.bf16.msra.mxu0 0
        %1496 = vmatprep.subr.bf16.mxu0 0
        %1497 = vmatpush1.bf16.msra.mxu0 0
        %1498 = vmatprep.subr.bf16.mxu0 0
        %1499 = vmatpush1.bf16.msra.mxu0 0
        %1500 = vmatprep.subr.bf16.mxu0 0
        %1501 = vmatpush1.bf16.msra.mxu0 0
        %1502 = vmatprep.mubr.bf16.mxu0 0
        %1503 = vmatmul.mubr.bf16.gmra.mrb[0].mxu0 %v1459
        %v1504 = vpop.f32.mrb[0].mxu0
        %v1505 = vadd.f32 0.0, %v1504
        %v1506 = vpop.f32.mrb[0].mxu0
        %v1507 = vpop.f32.mrb[0].mxu0
        %v1508 = vadd.f32 0.0, %v1507
        %v1509 = vpop.f32.mrb[0].mxu0
        %1510 = vmatprep.mubr.bf16.mxu0 0
        %1511 = vmatmul.mubr.bf16.gmra.mrb[0].mxu0 %v1462
        %v1512 = vpop.f32.mrb[0].mxu0
        %v1513 = vadd.f32 0.0, %v1512
        %v1514 = vpop.f32.mrb[0].mxu0
        %v1515 = vpop.f32.mrb[0].mxu0
        %v1516 = vadd.f32 0.0, %v1515
        %v1517 = vpop.f32.mrb[0].mxu0
        %1518 = vmatprep.mubr.bf16.mxu0 0
        %1519 = vmatmul.mubr.bf16.gmra.mrb[0].mxu0 %v1465
        %v1520 = vpop.f32.mrb[0].mxu0
        %v1521 = vadd.f32 0.0, %v1520
        %v1522 = vpop.f32.mrb[0].mxu0
        %v1523 = vpop.f32.mrb[0].mxu0
        %v1524 = vadd.f32 0.0, %v1523
        %v1525 = vpop.f32.mrb[0].mxu0
        %1526 = vmatprep.mubr.bf16.mxu0 0
        %1527 = vmatmul.mubr.bf16.gmra.mrb[0].mxu0 %v1468
        %v1528 = vpop.f32.mrb[0].mxu0
        %v1529 = vadd.f32 0.0, %v1528
        %v1530 = vpop.f32.mrb[0].mxu0
        %v1531 = vpop.f32.mrb[0].mxu0
        %v1532 = vadd.f32 0.0, %v1531
        %v1533 = vpop.f32.mrb[0].mxu0
        %1534 = vdwg.mxu0
        %v1535 = vrcp.pop %v1505
        %v1536 = vrcp.pop %v1508
        %v1537 = vrcp.pop %v1513
        %v1538 = vrcp.pop %v1516
        %v1539 = vrcp.pop %v1521
        %v1540 = vrcp.pop %v1524
        %v1541 = vrcp.pop %v1529
        %v1542 = vrcp.pop %v1532
        %1544 = vset.pattern.permute.xlu0 8
        %1545 = vperm.xlu0 %1544, %v1535
        %v1546 = vpop.permute.xlu0 %1545
        %1549 = vset.pattern.permute.xlu0 8
        %1550 = vperm.xlu0 %1549, %v1536
        %v1551 = vpop.permute.xlu0 %1550
        %1554 = vset.pattern.permute.xlu0 8
        %1555 = vperm.xlu0 %1554, %v1537
        %v1556 = vpop.permute.xlu0 %1555
        %1559 = vset.pattern.permute.xlu0 8
        %1560 = vperm.xlu0 %1559, %v1538
        %v1561 = vpop.permute.xlu0 %1560
        %1564 = vset.pattern.permute.xlu0 8
        %1565 = vperm.xlu0 %1564, %v1539
        %v1566 = vpop.permute.xlu0 %1565
        %1569 = vset.pattern.permute.xlu0 8
        %1570 = vperm.xlu0 %1569, %v1540
        %v1571 = vpop.permute.xlu0 %1570
        %1574 = vset.pattern.permute.xlu0 8
        %1575 = vperm.xlu0 %1574, %v1541
        %v1576 = vpop.permute.xlu0 %1575
        %1579 = vset.pattern.permute.xlu0 8
        %1580 = vperm.xlu0 %1579, %v1542
        %v1581 = vpop.permute.xlu0 %1580
        %v1583 = vmul.f32 %v1505, %v1546
        %v1584 = vmul.f32 %v1508, %v1551
        %v1585 = vmul.f32 %v1513, %v1556
        %v1586 = vmul.f32 %v1516, %v1561
        %v1587 = vmul.f32 %v1521, %v1566
        %v1588 = vmul.f32 %v1524, %v1571
        %v1589 = vmul.f32 %v1529, %v1576
        %v1590 = vmul.f32 %v1532, %v1581
        %v1591 = vpack.c.bf16 %v1584, %v1583
        %v1592 = vpack.c.bf16 %v1586, %v1585
        %v1593 = vpack.c.bf16 %v1588, %v1587
        %v1594 = vpack.c.bf16 %v1590, %v1589
        %1599 = vrot.lane.b32.xlu0 %v979, 8
        %v1600 = vpop.permute.xlu0 %1599
        %1601 = vrot.lane.b32.xlu0 %v980, 8
        %v1602 = vpop.permute.xlu0 %1601
        %1603 = vrot.lane.b32.xlu0 %v981, 8
        %v1604 = vpop.permute.xlu0 %1603
        %1605 = vrot.lane.b32.xlu0 %v982, 8
        %v1606 = vpop.permute.xlu0 %1605
        %1611 = vrot.lane.b32.xlu0 %v1285, 16
        %v1612 = vpop.permute.xlu0 %1611
        %1613 = vrot.lane.b32.xlu0 %v1286, 16
        %v1614 = vpop.permute.xlu0 %1613
        %1615 = vrot.lane.b32.xlu0 %v1287, 16
        %v1616 = vpop.permute.xlu0 %1615
        %1617 = vrot.lane.b32.xlu0 %v1288, 16
        %v1618 = vpop.permute.xlu0 %1617
        %1623 = vrot.lane.b32.xlu0 %v1591, 24
        %v1624 = vpop.permute.xlu0 %1623
        %1625 = vrot.lane.b32.xlu0 %v1592, 24
        %v1626 = vpop.permute.xlu0 %1625
        %1627 = vrot.lane.b32.xlu0 %v1593, 24
        %v1628 = vpop.permute.xlu0 %1627
        %1629 = vrot.lane.b32.xlu0 %v1594, 24
        %v1630 = vpop.permute.xlu0 %1629
        %v1633 = vsel %vm385, %v673, %v1600
        %v1636 = vsel %vm385, %v674, %v1602
        %v1639 = vsel %vm385, %v675, %v1604
        %v1642 = vsel %vm385, %v676, %v1606
        %vm1643 = vcmask 130048
        %v1645 = vsel %vm1643, %v1633, %v1612
        %v1647 = vsel %vm1643, %v1636, %v1614
        %v1649 = vsel %vm1643, %v1639, %v1616
        %v1651 = vsel %vm1643, %v1642, %v1618
        %vm1652 = vcmask 195584
        %v1654 = vsel %vm1652, %v1645, %v1624
        %v1656 = vsel %vm1652, %v1647, %v1626
        %v1658 = vsel %vm1652, %v1649, %v1628
        %v1660 = vsel %vm1652, %v1651, %v1630
        %s1661 = smul.addr %s244, 4
        %s1662 = scalar_lea.vmem %s3, %s1661
        %v1663 = vld [vmem:[%s1662] sm:$0xf]
        %v1664 = vld [vmem:[%s1662 + $0x4] sm:$0xf]
        %v1665 = vld [vmem:[%s1662 + $0x8] sm:$0xf]
        %v1666 = vld [vmem:[%s1662 + $0xc] sm:$0xf]
        %v1671 = vunpack.c.l.b16 %v1663
        %v1672 = vunpack.c.l.b16 %v1664
        %v1673 = vunpack.c.l.b16 %v1665
        %v1674 = vunpack.c.l.b16 %v1666
        %v1675 = vpack.c.b16 %v1672, %v1671
        %v1676 = vpack.c.b16 %v1674, %v1673
        %v1678 = vsel %vm291, %v1675, 0
        %v1681 = vsel %vm291, %v1676, 0
        %v1683 = vsel %vm291, %v1654, 0
        %v1685 = vsel %vm291, %v1656, 0
        %v1687 = vsel %vm291, %v1658, 0
        %v1689 = vsel %vm291, %v1660, 0
        %1691 = vmatprep.subr.bf16.mxu0 0
        %1692 = vmatpush1.bf16.xpose.msra.mxu0 %v1683
        %1693 = vmatprep.subr.bf16.mxu0 0
        %1694 = vmatpush1.bf16.xpose.msra.mxu0 %v1685
        %1695 = vmatprep.subr.bf16.mxu0 0
        %1696 = vmatpush1.bf16.xpose.msra.mxu0 %v1687
        %1697 = vmatprep.subr.bf16.mxu0 0
        %1698 = vmatpush1.bf16.xpose.msra.mxu0 %v1689
        %1699 = vmatprep.subr.bf16.mxu0 0
        %1700 = vmatpush1.bf16.xpose.msra.mxu0 0
        %1701 = vmatprep.subr.bf16.mxu0 0
        %1702 = vmatpush1.bf16.xpose.msra.mxu0 0
        %1703 = vmatprep.subr.bf16.mxu0 0
        %1704 = vmatpush1.bf16.xpose.msra.mxu0 0
        %1705 = vmatprep.subr.bf16.mxu0 0
        %1706 = vmatpush1.bf16.xpose.msra.mxu0 0
        %1707 = vmatprep.subr.bf16.mxu0 0
        %1708 = vmatpush1.bf16.xpose.msra.mxu0 0
        %1709 = vmatprep.subr.bf16.mxu0 0
        %1710 = vmatpush1.bf16.xpose.msra.mxu0 0
        %1711 = vmatprep.subr.bf16.mxu0 0
        %1712 = vmatpush1.bf16.xpose.msra.mxu0 0
        %1713 = vmatprep.subr.bf16.mxu0 0
        %1714 = vmatpush1.bf16.xpose.msra.mxu0 0
        %1715 = vmatprep.subr.bf16.mxu0 0
        %1716 = vmatpush1.bf16.xpose.msra.mxu0 0
        %1717 = vmatprep.subr.bf16.mxu0 0
        %1718 = vmatpush1.bf16.xpose.msra.mxu0 0
        %1719 = vmatprep.subr.bf16.mxu0 0
        %1720 = vmatpush1.bf16.xpose.msra.mxu0 0
        %1721 = vmatprep.subr.bf16.mxu0 0
        %1722 = vmatpush1.bf16.xpose.msra.mxu0 0
        %1723 = vmatprep.mubr.bf16.mxu0 0
        %1724 = vmatmul.mubr.bf16.gmra.mrb[0].mxu0 %v1678
        %v1725 = vpop.f32.mrb[0].mxu0
        %v1726 = vadd.f32 0.0, %v1725
        %v1727 = vpop.f32.mrb[0].mxu0
        %v1728 = vpop.f32.mrb[0].mxu0
        %v1729 = vadd.f32 0.0, %v1728
        %v1730 = vpop.f32.mrb[0].mxu0
        %1731 = vmatprep.mubr.bf16.mxu0 0
        %1732 = vmatmul.mubr.bf16.gmra.mrb[0].mxu0 %v1681
        %v1733 = vpop.f32.mrb[0].mxu0
        %v1734 = vadd.f32 0.0, %v1733
        %v1735 = vpop.f32.mrb[0].mxu0
        %v1736 = vpop.f32.mrb[0].mxu0
        %v1737 = vadd.f32 0.0, %v1736
        %v1738 = vpop.f32.mrb[0].mxu0
        %1739 = vdwg.mxu0
        %p1740 = scmp.eq.s32.totalorder %s24, 0
        // Predicated region
        $region41: #{tpu_custom_call.1} parent=39 // pred_check
          %p1741 = pneg %p1740
        $region42: #{tpu_custom_call.1} parent=39 // pred_check_branch
          %1743 = sbr.rel (%p1741) target = $region44
        $region43: #{tpu_custom_call.1} parent=39 // pred_region
          %1744 = vst.msk [vmem:[#allocation2] sm:$0xff] %vm475, 0.0
          %1745 = vst.msk [vmem:[#allocation2 + $0x8] sm:$0xff] %vm475, 0.0
          %1746 = vst.msk [vmem:[#allocation2 + $0x10] sm:$0xff] %vm475, 0.0
          %1747 = vst.msk [vmem:[#allocation2 + $0x18] sm:$0xff] %vm475, 0.0
        $region44: #{tpu_custom_call.1} parent=39 // pred_fallthru
          _
        %v1748 = vld [vmem:[#allocation2] sm:$0xff]
        %v1749 = vld [vmem:[#allocation2 + $0x8] sm:$0xff]
        %v1750 = vld [vmem:[#allocation2 + $0x10] sm:$0xff]
        %v1751 = vld [vmem:[#allocation2 + $0x18] sm:$0xff]
        %v1752 = vadd.f32 %v1748, %v1726
        %v1753 = vadd.f32 %v1749, %v1729
        %v1754 = vadd.f32 %v1750, %v1734
        %v1755 = vadd.f32 %v1751, %v1737
        %1756 = vst.msk [vmem:[#allocation2] sm:$0xff] %vm475, %v1752
        %1757 = vst.msk [vmem:[#allocation2 + $0x8] sm:$0xff] %vm475, %v1753
        %1758 = vst.msk [vmem:[#allocation2 + $0x10] sm:$0xff] %vm475, %v1754
        %1759 = vst.msk [vmem:[#allocation2 + $0x18] sm:$0xff] %vm475, %v1755
        // Predicated region
        $region45: #{tpu_custom_call.1} parent=39 // pred_check
          %p1760 = pneg %p1740
        $region46: #{tpu_custom_call.1} parent=39 // pred_check_branch
          %1762 = sbr.rel (%p1760) target = $region48
        $region47: #{tpu_custom_call.1} parent=39 // pred_region
          %v1763 = vld [vmem:[#allocation2] sm:$0xff]
          %v1764 = vld [vmem:[#allocation2 + $0x8] sm:$0xff]
          %v1765 = vld [vmem:[#allocation2 + $0x10] sm:$0xff]
          %v1766 = vld [vmem:[#allocation2 + $0x18] sm:$0xff]
          %v1767 = vld [vmem:[%s4] sm:$0xff]
          %v1768 = vld [vmem:[%s4 + $0x8] sm:$0xff]
          %v1769 = vld [vmem:[%s4 + $0x10] sm:$0xff]
          %v1770 = vld [vmem:[%s4 + $0x18] sm:$0xff]
          %1772 = vset.pattern.permute.xlu0 0
          %1773 = vperm.xlu0 %1772, %v1767
          %v1774 = vpop.permute.xlu0 %1773
          %1777 = vset.pattern.permute.xlu0 0
          %1778 = vperm.xlu0 %1777, %v1768
          %v1779 = vpop.permute.xlu0 %1778
          %1782 = vset.pattern.permute.xlu0 0
          %1783 = vperm.xlu0 %1782, %v1769
          %v1784 = vpop.permute.xlu0 %1783
          %1787 = vset.pattern.permute.xlu0 0
          %1788 = vperm.xlu0 %1787, %v1770
          %v1789 = vpop.permute.xlu0 %1788
          %v1791 = vadd.f32 %v1763, %v1774
          %v1792 = vadd.f32 %v1764, %v1779
          %v1793 = vadd.f32 %v1765, %v1784
          %v1794 = vadd.f32 %v1766, %v1789
          %1795 = vst.msk [vmem:[%s229] sm:$0xff] %vm475, %v1791
          %1796 = vst.msk [vmem:[%s229 + $0x8] sm:$0xff] %vm475, %v1792
          %1797 = vst.msk [vmem:[%s229 + $0x10] sm:$0xff] %vm475, %v1793
          %1798 = vst.msk [vmem:[%s229 + $0x18] sm:$0xff] %vm475, %v1794
        $region48: #{tpu_custom_call.1} parent=39 // pred_fallthru
          _
        %s1799 = sand.u32 %s149, 1
        %s1800 = scalar_lea.sflag [#allocation4], %s1799
        %s1801 = sand.u32 %s149, 1
        %s1802 = smul.addr %s1801, 32
        %s1803 = scalar_lea.vmem [#allocation3], %s1802
        // Predicated region
        $region49: #{tpu_custom_call.1} parent=39 // pred_check
          %p1804 = pneg %p159
        $region50: #{tpu_custom_call.1} parent=39 // pred_check_branch
          %1806 = sbr.rel (%p1804) target = $region52
        $region51: #{tpu_custom_call.1} parent=39 // pred_region
          %s1808 = ssub.s32 512, 512
          %1809 = vsyncadd %s1800, %s1808
          %s1810 = smul.addr %s23, 4
          %s1811 = smul.addr %s1810, 128
          %s1812 = scalar_lea.hbm %s5, %s1811
          %s1813 = sshll.u32 %s1803, 4
          %s1814 = int_to_ptr.vmem [resolvable:$true] %s1813
          %1819 = dma.vmem_to_hbm [thread:$0]  %s1814, 512, %s1812, %s1800, 128, 128, 8
        $region52: #{tpu_custom_call.1} parent=39 // pred_fallthru
          _
      $region40: #{tpu_custom_call.1} parent=5 // pred_fallthru
        _
      %p1820 = scmp.le.s32.totalorder 2, %s14
      // Predicated region
      $region53: #{tpu_custom_call.1} parent=5 // pred_check
        %p1821 = pneg %p1820
      $region54: #{tpu_custom_call.1} parent=5 // pred_check_branch
        %1823 = sbr.rel (%p1821) target = $region56
      $region55: #{tpu_custom_call.1} parent=5 // pred_region
        %s1824 = ssub.s32 %s14, 2
        // Predicated region
        $region57: #{tpu_custom_call.1} parent=55 // pred_check
          %p1825 = pneg %p165
        $region58: #{tpu_custom_call.1} parent=55 // pred_check_branch
          %1827 = sbr.rel (%p1825) target = $region60
        $region59: #{tpu_custom_call.1} parent=55 // pred_region
          %s1828 = sand.u32 %s150, 1
          %s1829 = scalar_lea.sflag [#allocation4], %s1828
          %s1830 = sand.u32 %s150, 1
          %s1831 = smul.addr %s1830, 32
          %s1832 = scalar_lea.vmem [#allocation3], %s1831
          %1833 = dma.done %s1829, 512
        $region60: #{tpu_custom_call.1} parent=55 // pred_fallthru
          _
      $region56: #{tpu_custom_call.1} parent=5 // pred_fallthru
        _
    $region6: #{tpu_custom_call.1} parent=1 // loop_footer
      %s18 = sadd.s32 1, %s14
    $region7: #{tpu_custom_call.1} parent=1 // loop_footer_branch
      %13 = sbr.rel target = $region3
    $region8: #{tpu_custom_call.1} parent=1 // loop_exit
      _
    %1834 = vsyncpa [#allocation4], 1
    %s1835 = scalar_lea.sflag [#allocation4], 1
    %1836 = vsyncpa %s1835, 1

</llo_original>
